<compile_context>
chip_gen: v7x
topology: tpu7x:2x2x1
jax: 0.10.0
libtpu: 0.0.40
codegen_flags: <defaults>
</compile_context>

<pallas_src>
import functools
import math

import numpy as np
import jax
import jax.numpy as jnp
from jax import lax
from jax.experimental import pallas as pl
from jax.experimental.pallas import tpu as pltpu

_LANE = 128


def _round_up(x, m):
    return ((x + m - 1) // m) * m


def _pick_tile(dim, prefs):
    """Largest preferred tile <= dim that divides dim (dims already padded)."""
    for p in prefs:
        if p <= dim and dim % p == 0:
            return p
    return dim


def _vmem_limit_bytes():
    """Per-generation scoped-VMEM limit: ~96 MiB on 128-MiB parts (v5e/v6e), 48 MiB on v7x."""
    phys = 64 * 1024 * 1024
    try:
        info = pltpu.get_tpu_info()
        phys = int(getattr(info, "vmem_capacity_bytes", phys))
    except Exception:
        pass
    if phys >= 128 * 1024 * 1024:
        return 96 * 1024 * 1024
    return 48 * 1024 * 1024


_VMEM_LIMIT = _vmem_limit_bytes()


# ----------------------------- Pallas kernels -----------------------------

def _gcn_layer_kernel(a_ref, x_ref, w_ref, b_ref, o_ref, acc_ref, *, apply_relu):
    """One (tm,tn) output tile of [relu](A @ (X @ W) + b); W resident, f32 k-accum."""
    @pl.when(pl.program_id(2) == 0)
    def _():
        acc_ref[...] = jnp.zeros_like(acc_ref)

    xw = jnp.dot(x_ref[...], w_ref[...], preferred_element_type=jnp.float32)
    acc_ref[...] += jnp.dot(a_ref[...], xw.astype(a_ref.dtype),
                            preferred_element_type=jnp.float32)

    @pl.when(pl.program_id(2) == pl.num_programs(2) - 1)
    def _():
        y = acc_ref[...] + b_ref[...]
        if apply_relu:
            y = jnp.maximum(y, 0.0)
        o_ref[...] = y.astype(o_ref.dtype)


def gcn_layer_pallas(A, X, W, bias, *, relu=True, out_dtype=jnp.float32):
    """out = [relu](A @ (X @ W) + bias).

    A: (M, K) bf16 dense normalized adjacency, X: (K, Kw) bf16 features,
    W: (Kw, Nout) bf16 weight (held VMEM-resident), bias: (Nout,) f32.
    All dims already padded to lane multiples.
    """
    M, K = A.shape
    K2, Kw = X.shape
    Kw2, Nout = W.shape
    assert K == K2 and Kw == Kw2, (A.shape, X.shape, W.shape)
    bias = bias.reshape(1, Nout).astype(jnp.float32)
    out_itemsize = jnp.dtype(out_dtype).itemsize

    tn = _pick_tile(Nout, (256, 128))
    tk = _pick_tile(K, (512, 256, 128))

    # Grow tm aggressively (amortizes per-step overhead + cuts X re-fetch traffic),
    # but cap at M/2 when possible so the parallel M axis keeps >= 2 tiles (v7x
    # megacore needs work for both TensorCores).  Budget against scoped VMEM.
    tm_cap = M // 2 if M >= 2 * _LANE else M
    tm = _pick_tile(M, (128, 8))
    budget = int(_VMEM_LIMIT * 0.8)
    for cand in (2048, 1024, 512, 256, 128):
        if cand > tm_cap or M % cand:
            continue
        need = (2 * cand * tk * A.dtype.itemsize      # A tiles, double-buffered
                + 2 * tk * Kw * X.dtype.itemsize      # X tiles, double-buffered
                + 2 * Kw * tn * W.dtype.itemsize      # resident W
                + 2 * tn * 4                          # bias
                + cand * tn * 4                       # f32 accumulator scratch
                + 2 * cand * tn * out_itemsize)       # output tiles, double-buffered
        if need <= budget:
            tm = cand
            break

    n_i, n_j, n_k = M // tm, Nout // tn, K // tk
    cost = pl.CostEstimate(
        flops=2 * M * K * Nout + 2 * n_i * n_j * K * Kw * Nout,
        transcendentals=0,
        bytes_accessed=(M * K * A.dtype.itemsize * n_j
                        + K * Kw * X.dtype.itemsize * n_i * n_j
                        + Kw * Nout * W.dtype.itemsize
                        + Nout * 4
                        + M * Nout * out_itemsize))

    # TODO(synk): if an xprof trace on v5e still shows exposed DMA on the (effectively
    # 1-D) A stream, add pipeline_mode=pl.Buffered(3) on the A BlockSpec below.
    return pl.pallas_call(
        functools.partial(_gcn_layer_kernel, apply_relu=relu),
        out_shape=jax.ShapeDtypeStruct((M, Nout), out_dtype),
        grid_spec=pltpu.PrefetchScalarGridSpec(
            num_scalar_prefetch=0,
            grid=(n_i, n_j, n_k),
            in_specs=[
                pl.BlockSpec((tm, tk), lambda i, j, k: (i, k)),   # A
                pl.BlockSpec((tk, Kw), lambda i, j, k: (k, 0)),   # X
                pl.BlockSpec((Kw, tn), lambda i, j, k: (0, j)),   # W (resident)
                pl.BlockSpec((1, tn), lambda i, j, k: (0, j)),    # bias
            ],
            out_specs=pl.BlockSpec((tm, tn), lambda i, j, k: (i, j)),
            scratch_shapes=[pltpu.VMEM((tm, tn), jnp.float32)],
        ),
        compiler_params=pltpu.CompilerParams(
            dimension_semantics=("parallel", "parallel", "arbitrary"),
            vmem_limit_bytes=_VMEM_LIMIT),
        cost_estimate=cost,
    )(A, X, W, bias)


def _edge_score_kernel(xs_ref, xd_ref, o_ref):
    prod = xs_ref[...].astype(jnp.float32) * xd_ref[...].astype(jnp.float32)
    o_ref[...] = jnp.sum(prod, axis=-1, keepdims=True)


def edge_scores_pallas(xs, xd):
    """xs, xd: (Ep, Hp) gathered endpoint features (bf16/f32). Returns (Ep,) f32 scores."""
    Ep, Hp = xs.shape
    te = _pick_tile(Ep, (1024, 512, 256, 128))
    out = pl.pallas_call(
        _edge_score_kernel,
        out_shape=jax.ShapeDtypeStruct((Ep, 1), jnp.float32),
        grid_spec=pltpu.PrefetchScalarGridSpec(
            num_scalar_prefetch=0,
            grid=(Ep // te,),
            in_specs=[pl.BlockSpec((te, Hp), lambda e: (e, 0)),
                      pl.BlockSpec((te, Hp), lambda e: (e, 0))],
            out_specs=pl.BlockSpec((te, 1), lambda e: (e, 0)),
        ),
        compiler_params=pltpu.CompilerParams(
            dimension_semantics=("parallel",),
            vmem_limit_bytes=_VMEM_LIMIT),
    )(xs, xd)
    return out[:, 0]


def _head_kernel(p_ref, x_ref, w1_ref, b1_ref, w2_ref, b2_ref, o_ref, pooled_ref,
                 *, num_classes):
    """mean-pool (accumulated over node blocks) -> relu(lin1) -> lin2 -> log_softmax."""
    k = pl.program_id(0)

    @pl.when(k == 0)
    def _():
        pooled_ref[...] = jnp.zeros_like(pooled_ref)

    pooled_ref[...] += jnp.dot(p_ref[...], x_ref[...],
                               preferred_element_type=jnp.float32)

    @pl.when(k == pl.num_programs(0) - 1)
    def _():
        h = jnp.maximum(
            jnp.dot(pooled_ref[...], w1_ref[...],
                    preferred_element_type=jnp.float32) + b1_ref[...], 0.0)
        # TODO(synk): F.dropout(p=0.5) is identity in eval mode; stochastic dropout
        # for train_phase=True is not implemented.
        logits = jnp.dot(h, w2_ref[...],
                         preferred_element_type=jnp.float32) + b2_ref[...]
        col = lax.broadcasted_iota(jnp.int32, logits.shape, 1)
        logits = jnp.where(col < num_classes, logits, jnp.float32(-1e30))
        m = jnp.max(logits, axis=-1, keepdims=True)
        z = logits - m
        lse = jnp.log(jnp.sum(jnp.exp(z), axis=-1, keepdims=True))
        o_ref[...] = z - lse


def head_pallas(P, h, w1, b1, w2, b2, num_classes):
    """Head with a grid over the node axis: h is streamed in (tk, Hp) blocks so it is
    never whole-array resident in VMEM (safe for v7x's 64 MiB VMEM)."""
    Gp, Np = P.shape
    Np2, Hp = h.shape
    Cp = w2.shape[1]
    assert Np == Np2
    tk = _pick_tile(Np, (512, 256, 128))
    return pl.pallas_call(
        functools.partial(_head_kernel, num_classes=num_classes),
        out_shape=jax.ShapeDtypeStruct((Gp, Cp), jnp.float32),
        grid_spec=pltpu.PrefetchScalarGridSpec(
            num_scalar_prefetch=0,
            grid=(Np // tk,),
            in_specs=[
                pl.BlockSpec((Gp, tk), lambda k: (0, k)),   # pooling matrix block
                pl.BlockSpec((tk, Hp), lambda k: (k, 0)),   # node-feature block
                pl.BlockSpec((Hp, Hp), lambda k: (0, 0)),   # w1 (resident)
                pl.BlockSpec((1, Hp), lambda k: (0, 0)),    # b1
                pl.BlockSpec((Hp, Cp), lambda k: (0, 0)),   # w2
                pl.BlockSpec((1, Cp), lambda k: (0, 0)),    # b2
            ],
            out_specs=pl.BlockSpec((Gp, Cp), lambda k: (0, 0)),
            scratch_shapes=[pltpu.VMEM((Gp, Hp), jnp.float32)],
        ),
        compiler_params=pltpu.CompilerParams(
            dimension_semantics=("arbitrary",),
            vmem_limit_bytes=_VMEM_LIMIT),
    )(P, h, w1, b1.reshape(1, -1), w2, b2.reshape(1, -1))


# ------------------------------ device-side glue ------------------------------

def gcn_norm_dense(src, dst, edge_weight, num_nodes, padded_nodes):
    """Dense symmetric GCN normalization with self-loops, built at padded size (f32)."""
    E = src.shape[0]
    if edge_weight is None:
        edge_weight = jnp.ones((E,), jnp.float32)
    loop = jnp.arange(num_nodes, dtype=src.dtype)
    src_f = jnp.concatenate([src, loop])
    dst_f = jnp.concatenate([dst, loop])
    w_f = jnp.concatenate([edge_weight.astype(jnp.float32),
                           jnp.ones((num_nodes,), jnp.float32)])
    deg = jnp.zeros((num_nodes,), jnp.float32).at[dst_f].add(w_f)
    dinv = jnp.where(deg > 0, lax.rsqrt(jnp.maximum(deg, 1e-12)), 0.0)
    norm = dinv[src_f] * w_f * dinv[dst_f]
    A = jnp.zeros((padded_nodes, padded_nodes), jnp.float32).at[dst_f, src_f].add(norm)
    return A


def _topk_sampled_edges(scores, masked, edge_graph, graph_start, k_arr, rev_idx):
    """Deterministic per-graph top-k over (src<dst) edges, mirrored onto reverse edges."""
    # TODO(synk): GraphIMLETopK Gumbel/IMLE perturbation for train_phase=True not implemented.
    E = scores.shape[0]
    neg = jnp.where(masked, -scores, jnp.inf)          # unmasked edges sort last in-graph
    o1 = jnp.argsort(neg)                              # secondary key: descending score
    order = o1[jnp.argsort(edge_graph[o1])]            # stable primary key: graph id
    g_sorted = edge_graph[order]
    rank = jnp.arange(E) - graph_start[g_sorted]       # rank within graph (masked first)
    sel = (rank < k_arr[g_sorted]) & masked[order]
    sampled = jnp.zeros((E,), jnp.float32).at[order].set(sel.astype(jnp.float32))
    sampled = jnp.maximum(sampled, sampled[rev_idx])   # mirror onto reverse edges
    return sampled


@jax.jit
def _device_forward(x, conv_w, conv_b, w1, b1, w2, b2,
                    src, dst, edge_graph, masked, graph_start, k_arr, rev_idx, P):
    N, F = x.shape
    Gp, Np = P.shape
    H = w1.shape[0]
    C = w2.shape[1]
    E = src.shape[0]
    Fp = _round_up(F, _LANE)
    Hp = _round_up(H, _LANE)
    Cp = _round_up(C, _LANE)
    Ep = _round_up(E, _LANE)
    num_layers = len(conv_w)

    # zero-pad features / weights to lane multiples; bf16 operands, f32 accumulation in-kernel
    xp = jnp.zeros((Np, Fp), jnp.bfloat16).at[:N, :F].set(x.astype(jnp.bfloat16))
    w0 = jnp.zeros((Fp, Hp), jnp.bfloat16).at[:F, :H].set(conv_w[0].astype(jnp.bfloat16))
    b0 = jnp.zeros((Hp,), jnp.float32).at[:H].set(conv_b[0])

    # conv0: relu(A0 @ (X @ W0) + b0) in one fused kernel (W0 stays VMEM-resident)
    A0 = gcn_norm_dense(src, dst, None, N, Np).astype(jnp.bfloat16)
    h = gcn_layer_pallas(A0, xp, w0, b0, relu=True,
                         out_dtype=jnp.float32 if num_layers == 1 else jnp.bfloat16)

    # edge scores (x[src]*x[dst]).sum(-1): bf16 ROW gathers at pre-padded indices
    # (no transpose / column gather / pad-copy HBM passes), f32 reduce in the kernel.
    src_pad = jnp.zeros((Ep,), src.dtype).at[:E].set(src)
    dst_pad = jnp.zeros((Ep,), dst.dtype).at[:E].set(dst)
    xs = jnp.take(h, src_pad, axis=0)
    xd = jnp.take(h, dst_pad, axis=0)
    edge_scores = edge_scores_pallas(xs, xd)[:E]

    sampled = _topk_sampled_edges(edge_scores, masked, edge_graph, graph_start,
                                  k_arr, rev_idx)
    edge_weights = edge_scores * sampled

    # remaining convs share the weighted adjacency; X@W is fused into the A matmul so
    # the (Np, Hp) hw intermediate never round-trips HBM; h stays bf16 except last layer.
    A1 = gcn_norm_dense(src, dst, edge_weights, N, Np).astype(jnp.bfloat16)
    for l in range(1, num_layers):
        wl = jnp.zeros((Hp, Hp), jnp.bfloat16).at[:H, :H].set(
            conv_w[l].astype(jnp.bfloat16))
        bl = jnp.zeros((Hp,), jnp.float32).at[:H].set(conv_b[l])
        last = (l == num_layers - 1)
        h = gcn_layer_pallas(A1, h, wl, bl, relu=True,
                             out_dtype=jnp.float32 if last else jnp.bfloat16)

    # head (pooled accumulated over node blocks inside the kernel)
    w1p = jnp.zeros((Hp, Hp), jnp.float32).at[:H, :H].set(w1)
    b1p = jnp.zeros((Hp,), jnp.float32).at[:H].set(b1)
    w2p = jnp.zeros((Hp, Cp), jnp.float32).at[:H, :C].set(w2)
    b2p = jnp.zeros((Cp,), jnp.float32).at[:C].set(b2)
    log_probs = head_pallas(P, h, w1p, b1p, w2p, b2p, C)[:, :C]
    return log_probs, sampled


# ------------------------------ host wrapper ------------------------------

def l2xgcn_forward(x, edge_index, batch, params, ratio, train_phase=False):
    """Forward pass. Host preprocessing only touches static graph structure; all
    data-dependent work (including the edge top-k) runs on-device under one jit."""
    ei = np.asarray(edge_index)
    bt = np.asarray(batch)
    N = int(x.shape[0])
    E = int(ei.shape[1])
    G = int(bt.max()) + 1
    Np = _round_up(N, _LANE)
    Gp = _round_up(G, 8)

    src_np = ei[0].astype(np.int32)
    dst_np = ei[1].astype(np.int32)
    edge_graph_np = bt[src_np].astype(np.int32)
    sections = np.bincount(edge_graph_np, minlength=G).astype(np.int64).tolist()

    mask_np = src_np < dst_np
    n_masked = np.bincount(edge_graph_np[mask_np], minlength=G)
    k_np = np.where(n_masked > 0,
                    np.maximum(1, np.ceil(ratio * n_masked)), 0).astype(np.int32)
    counts_all = np.bincount(edge_graph_np, minlength=G)
    graph_start_np = np.concatenate([[0], np.cumsum(counts_all)[:-1]]).astype(np.int32)

    # reverse-edge index: edge e -> edge with (src,dst) swapped (or e itself if absent)
    key = src_np.astype(np.int64) * N + dst_np
    rkey = dst_np.astype(np.int64) * N + src_np
    order = np.argsort(key, kind="stable")
    pos = np.clip(np.searchsorted(key[order], rkey), 0, max(E - 1, 0))
    found = key[order[pos]] == rkey
    rev_idx_np = np.where(found, order[pos], np.arange(E)).astype(np.int32)

    # mean-pool matrix P[g, n] = 1/|V_g| (graph rows padded to 8, node cols to 128)
    counts = np.bincount(bt, minlength=G).astype(np.float32)
    P_np = np.zeros((Gp, Np), np.float32)
    P_np[bt, np.arange(N)] = 1.0 / counts[bt]

    log_probs, sampled = _device_forward(
        jnp.asarray(x, jnp.float32),
        tuple(params["conv_w"]), tuple(params["conv_b"]),
        params["w1"], params["b1"], params["w2"], params["b2"],
        jnp.asarray(src_np), jnp.asarray(dst_np), jnp.asarray(edge_graph_np),
        jnp.asarray(mask_np), jnp.asarray(graph_start_np), jnp.asarray(k_np),
        jnp.asarray(rev_idx_np), jnp.asarray(P_np))
    return log_probs[:G], sampled, sections


# ------------------------------ params & demo ------------------------------

def init_params(key, input_dim, hidden, output_dim, num_layers):
    def glorot(k, shape):
        lim = math.sqrt(6.0 / (shape[0] + shape[1]))
        return jax.random.uniform(k, shape, jnp.float32, -lim, lim)

    keys = jax.random.split(key, 2 * num_layers + 4)
    conv_w, conv_b = [], []
    dims = [input_dim] + [hidden] * num_layers
    for l in range(num_layers):
        conv_w.append(glorot(keys[2 * l], (dims[l], dims[l + 1])))
        conv_b.append(jnp.zeros((dims[l + 1],), jnp.float32))
    w1 = glorot(keys[2 * num_layers], (hidden, hidden))
    b1 = jnp.zeros((hidden,), jnp.float32)
    w2 = glorot(keys[2 * num_layers + 1], (hidden, output_dim))
    b2 = jnp.zeros((output_dim,), jnp.float32)
    return dict(conv_w=conv_w, conv_b=conv_b, w1=w1, b1=b1, w2=w2, b2=b2)


def build_example_graph():
    """Two graphs of 8 nodes each: ring + chords, undirected (both directions)."""
    edges = []
    for g in range(2):
        off = 8 * g
        und = [(i, (i + 1) % 8) for i in range(8)] + [(i, (i + 2) % 8) for i in range(0, 8, 2)]
        for (a, b) in und:
            edges.append((off + a, off + b))
            edges.append((off + b, off + a))
    edge_index = np.array(edges, dtype=np.int32).T  # [2, E]
    batch = np.array([0] * 8 + [1] * 8, dtype=np.int32)
    return jnp.asarray(edge_index), jnp.asarray(batch)


if __name__ == "__main__":
    num_nodes = 16
    num_features = 8
    hidden = 32
    num_classes = 4
    num_layers = 3
    ratio = 0.5

    key = jax.random.PRNGKey(0)
    kx, kp = jax.random.split(key)
    x = jax.random.normal(kx, (num_nodes, num_features), jnp.float32)
    edge_index, batch = build_example_graph()
    params = init_params(kp, num_features, hidden, num_classes, num_layers)

    log_probs, sampled_edges, sections = l2xgcn_forward(
        x, edge_index, batch, params, ratio, train_phase=False)
    jax.block_until_ready(log_probs)
    jax.block_until_ready(sampled_edges)

    assert log_probs.shape == (2, num_classes)
    assert sampled_edges.shape == (edge_index.shape[1],)
    # log_softmax rows sum to 1 in prob space
    assert np.allclose(np.exp(np.asarray(log_probs)).sum(-1), 1.0, atol=1e-4)
    print("KERNEL_OK")
</pallas_src>

<mosaic_0001>
module attributes {stable_mosaic.version = 11 : i64} {
  func.func private @main(%arg0: i32) attributes {dimension_semantics = [#tpu.dimension_semantics<core_parallel>], iteration_bounds = array<i64: 2>, tpu.core_type = #tpu.core_type<sc_scalar_subcore>, window_params = []} {
    return
  }
}

module attributes {stable_mosaic.version = 11 : i64} {
  func.func private @main(%arg0: i32) attributes {dimension_semantics = [#tpu.dimension_semantics<core_parallel>], iteration_bounds = array<i64: 2>, tpu.core_type = #tpu.core_type<sc_scalar_subcore>, window_params = []} {
    return
  }
}

module attributes {stable_mosaic.version = 11 : i64} {
  func.func @_gcn_layer_kernel(%arg0: i32, %arg1: i32, %arg2: i32, %arg3: memref<128x128xbf16, #tpu.memory_space<vmem>>, %arg4: memref<128x128xbf16, #tpu.memory_space<vmem>>, %arg5: memref<128x128xbf16, #tpu.memory_space<vmem>>, %arg6: memref<1x128xf32, #tpu.memory_space<vmem>>, %arg7: memref<128x128xbf16, #tpu.memory_space<vmem>>, %arg8: memref<128x128xf32, #tpu.memory_space<vmem>>) attributes {dimension_semantics = [#tpu.dimension_semantics<parallel>, #tpu.dimension_semantics<parallel>, #tpu.dimension_semantics<arbitrary>], iteration_bounds = array<i64: 1, 1, 1>, scalar_prefetch = 0 : i64, scratch_operands = 1 : i64, tpu.core_type = #tpu.core_type<tc>, window_params = [{transform_indices = @transform_0, window_bounds = array<i64: 128, 128>}, {transform_indices = @transform_1, window_bounds = array<i64: 128, 128>}, {transform_indices = @transform_2, window_bounds = array<i64: 128, 128>}, {transform_indices = @transform_3, window_bounds = array<i64: 1, 128>}, {transform_indices = @transform_4, window_bounds = array<i64: 128, 128>}]} {
    %c0_i32 = arith.constant 0 : i32
    %0 = arith.cmpi eq, %arg2, %c0_i32 : i32
    %1 = arith.extui %0 : i1 to i32
    %c0_i32_0 = arith.constant 0 : i32
    %2 = arith.cmpi ne, %1, %c0_i32_0 : i32
    scf.if %2 {
      %cst_13 = arith.constant 0.000000e+00 : f32
      %15 = vector.broadcast %cst_13 : f32 to vector<128x128xf32>
      %c0_14 = arith.constant 0 : index
      %c0_15 = arith.constant 0 : index
      %16 = vector.load %arg8[%c0_14, %c0_15] : memref<128x128xf32, #tpu.memory_space<vmem>>, vector<128x128xf32>
      tpu.vector_store %arg8[%c0_14, %c0_15], %15 {strides = array<i32>} : memref<128x128xf32, #tpu.memory_space<vmem>>, vector<128x128xf32>,
    } else {
    }
    %c0 = arith.constant 0 : index
    %c0_1 = arith.constant 0 : index
    %3 = vector.load %arg4[%c0, %c0_1] : memref<128x128xbf16, #tpu.memory_space<vmem>>, vector<128x128xbf16>
    %c0_2 = arith.constant 0 : index
    %c0_3 = arith.constant 0 : index
    %4 = vector.load %arg5[%c0_2, %c0_3] : memref<128x128xbf16, #tpu.memory_space<vmem>>, vector<128x128xbf16>
    %cst = arith.constant dense<0.000000e+00> : vector<128x128xf32>
    %5 = tpu.matmul %3, %4, %cst {dimension_numbers = #tpu.dot_dimension_numbers<[1], [0], [0], [1], [0, 0, 1, 1], [], []>} : vector<128x128xbf16>, vector<128x128xbf16>, vector<128x128xf32> -> vector<128x128xf32>
    %c0_4 = arith.constant 0 : index
    %c0_5 = arith.constant 0 : index
    %6 = vector.load %arg8[%c0_4, %c0_5] : memref<128x128xf32, #tpu.memory_space<vmem>>, vector<128x128xf32>
    %c0_6 = arith.constant 0 : index
    %c0_7 = arith.constant 0 : index
    %7 = vector.load %arg3[%c0_6, %c0_7] : memref<128x128xbf16, #tpu.memory_space<vmem>>, vector<128x128xbf16>
    %8 = arith.truncf %5 : vector<128x128xf32> to vector<128x128xbf16>
    %cst_8 = arith.constant dense<0.000000e+00> : vector<128x128xf32>
    %9 = tpu.matmul %7, %8, %cst_8 {dimension_numbers = #tpu.dot_dimension_numbers<[1], [0], [0], [1], [0, 0, 1, 1], [], []>} : vector<128x128xbf16>, vector<128x128xbf16>, vector<128x128xf32> -> vector<128x128xf32>
    %10 = arith.addf %6, %9 : vector<128x128xf32>
    %c0_9 = arith.constant 0 : index
    %c0_10 = arith.constant 0 : index
    %11 = vector.load %arg8[%c0_9, %c0_10] : memref<128x128xf32, #tpu.memory_space<vmem>>, vector<128x128xf32>
    tpu.vector_store %arg8[%c0_9, %c0_10], %10 {strides = array<i32>} : memref<128x128xf32, #tpu.memory_space<vmem>>, vector<128x128xf32>,
    %c0_i32_11 = arith.constant 0 : i32
    %12 = arith.cmpi eq, %arg2, %c0_i32_11 : i32
    %13 = arith.extui %12 : i1 to i32
    %c0_i32_12 = arith.constant 0 : i32
    %14 = arith.cmpi ne, %13, %c0_i32_12 : i32
    scf.if %14 {
      %c0_13 = arith.constant 0 : index
      %c0_14 = arith.constant 0 : index
      %15 = vector.load %arg8[%c0_13, %c0_14] : memref<128x128xf32, #tpu.memory_space<vmem>>, vector<128x128xf32>
      %c0_15 = arith.constant 0 : index
      %c0_16 = arith.constant 0 : index
      %16 = vector.load %arg6[%c0_15, %c0_16] : memref<1x128xf32, #tpu.memory_space<vmem>>, vector<1x128xf32>
      %17 = vector.broadcast %16 : vector<1x128xf32> to vector<128x128xf32>
      %18 = arith.addf %15, %17 : vector<128x128xf32>
      %cst_17 = arith.constant 0.000000e+00 : f32
      %19 = vector.broadcast %cst_17 : f32 to vector<128x128xf32>
      %20 = arith.maximumf %18, %19 : vector<128x128xf32>
      %21 = arith.truncf %20 : vector<128x128xf32> to vector<128x128xbf16>
      %c0_18 = arith.constant 0 : index
      %c0_19 = arith.constant 0 : index
      %22 = vector.load %arg7[%c0_18, %c0_19] : memref<128x128xbf16, #tpu.memory_space<vmem>>, vector<128x128xbf16>
      tpu.vector_store %arg7[%c0_18, %c0_19], %21 {strides = array<i32>} : memref<128x128xbf16, #tpu.memory_space<vmem>>, vector<128x128xbf16>,
    } else {
    }
    return
  }
  func.func @transform_0(%arg0: i32, %arg1: i32, %arg2: i32) -> (i32, i32) {
    %c0_i32 = arith.constant 0 : i32
    return %arg0, %arg2 : i32, i32
  }
  func.func @transform_1(%arg0: i32, %arg1: i32, %arg2: i32) -> (i32, i32) {
    %c0_i32 = arith.constant 0 : i32
    %c0_i32_0 = arith.constant 0 : i32
    return %arg2, %c0_i32 : i32, i32
  }
  func.func @transform_2(%arg0: i32, %arg1: i32, %arg2: i32) -> (i32, i32) {
    %c0_i32 = arith.constant 0 : i32
    %c0_i32_0 = arith.constant 0 : i32
    return %c0_i32, %arg1 : i32, i32
  }
  func.func @transform_3(%arg0: i32, %arg1: i32, %arg2: i32) -> (i32, i32) {
    %c0_i32 = arith.constant 0 : i32
    %c0_i32_0 = arith.constant 0 : i32
    return %c0_i32, %arg1 : i32, i32
  }
  func.func @transform_4(%arg0: i32, %arg1: i32, %arg2: i32) -> (i32, i32) {
    %c0_i32 = arith.constant 0 : i32
    return %arg0, %arg1 : i32, i32
  }
}

module attributes {stable_mosaic.version = 11 : i64} {
  func.func @_edge_score_kernel(%arg0: i32, %arg1: memref<128x128xbf16, #tpu.memory_space<vmem>>, %arg2: memref<128x128xbf16, #tpu.memory_space<vmem>>, %arg3: memref<128x1xf32, #tpu.memory_space<vmem>>) attributes {dimension_semantics = [#tpu.dimension_semantics<parallel>], iteration_bounds = array<i64: 1>, scalar_prefetch = 0 : i64, scratch_operands = 0 : i64, tpu.core_type = #tpu.core_type<tc>, window_params = [{transform_indices = @transform_0, window_bounds = array<i64: 128, 128>}, {transform_indices = @transform_1, window_bounds = array<i64: 128, 128>}, {transform_indices = @transform_2, window_bounds = array<i64: 128, 1>}]} {
    %c0 = arith.constant 0 : index
    %c0_0 = arith.constant 0 : index
    %0 = vector.load %arg1[%c0, %c0_0] : memref<128x128xbf16, #tpu.memory_space<vmem>>, vector<128x128xbf16>
    %1 = arith.extf %0 : vector<128x128xbf16> to vector<128x128xf32>
    %c0_1 = arith.constant 0 : index
    %c0_2 = arith.constant 0 : index
    %2 = vector.load %arg2[%c0_1, %c0_2] : memref<128x128xbf16, #tpu.memory_space<vmem>>, vector<128x128xbf16>
    %3 = arith.extf %2 : vector<128x128xbf16> to vector<128x128xf32>
    %4 = arith.mulf %1, %3 : vector<128x128xf32>
    %cst = arith.constant dense<0.000000e+00> : vector<128xf32>
    %5 = vector.multi_reduction <add>, %4, %cst [1] : vector<128x128xf32> to vector<128xf32>
    %6 = vector.shape_cast %5 : vector<128xf32> to vector<128x1xf32>
    %c0_3 = arith.constant 0 : index
    %c0_4 = arith.constant 0 : index
    %7 = vector.load %arg3[%c0_3, %c0_4] : memref<128x1xf32, #tpu.memory_space<vmem>>, vector<128x1xf32>
    tpu.vector_store %arg3[%c0_3, %c0_4], %6 {strides = array<i32>} : memref<128x1xf32, #tpu.memory_space<vmem>>, vector<128x1xf32>,
    return
  }
  func.func @transform_0(%arg0: i32) -> (i32, i32) {
    %c0_i32 = arith.constant 0 : i32
    %c0_i32_0 = arith.constant 0 : i32
    return %arg0, %c0_i32 : i32, i32
  }
  func.func @transform_1(%arg0: i32) -> (i32, i32) {
    %c0_i32 = arith.constant 0 : i32
    %c0_i32_0 = arith.constant 0 : i32
    return %arg0, %c0_i32 : i32, i32
  }
  func.func @transform_2(%arg0: i32) -> (i32, i32) {
    %c0_i32 = arith.constant 0 : i32
    %c0_i32_0 = arith.constant 0 : i32
    return %arg0, %c0_i32 : i32, i32
  }
}

module attributes {stable_mosaic.version = 11 : i64} {
  func.func @_gcn_layer_kernel(%arg0: i32, %arg1: i32, %arg2: i32, %arg3: memref<128x128xbf16, #tpu.memory_space<vmem>>, %arg4: memref<128x128xbf16, #tpu.memory_space<vmem>>, %arg5: memref<128x128xbf16, #tpu.memory_space<vmem>>, %arg6: memref<1x128xf32, #tpu.memory_space<vmem>>, %arg7: memref<128x128xf32, #tpu.memory_space<vmem>>, %arg8: memref<128x128xf32, #tpu.memory_space<vmem>>) attributes {dimension_semantics = [#tpu.dimension_semantics<parallel>, #tpu.dimension_semantics<parallel>, #tpu.dimension_semantics<arbitrary>], iteration_bounds = array<i64: 1, 1, 1>, scalar_prefetch = 0 : i64, scratch_operands = 1 : i64, tpu.core_type = #tpu.core_type<tc>, window_params = [{transform_indices = @transform_0, window_bounds = array<i64: 128, 128>}, {transform_indices = @transform_1, window_bounds = array<i64: 128, 128>}, {transform_indices = @transform_2, window_bounds = array<i64: 128, 128>}, {transform_indices = @transform_3, window_bounds = array<i64: 1, 128>}, {transform_indices = @transform_4, window_bounds = array<i64: 128, 128>}]} {
    %c0_i32 = arith.constant 0 : i32
    %0 = arith.cmpi eq, %arg2, %c0_i32 : i32
    %1 = arith.extui %0 : i1 to i32
    %c0_i32_0 = arith.constant 0 : i32
    %2 = arith.cmpi ne, %1, %c0_i32_0 : i32
    scf.if %2 {
      %cst_13 = arith.constant 0.000000e+00 : f32
      %15 = vector.broadcast %cst_13 : f32 to vector<128x128xf32>
      %c0_14 = arith.constant 0 : index
      %c0_15 = arith.constant 0 : index
      %16 = vector.load %arg8[%c0_14, %c0_15] : memref<128x128xf32, #tpu.memory_space<vmem>>, vector<128x128xf32>
      tpu.vector_store %arg8[%c0_14, %c0_15], %15 {strides = array<i32>} : memref<128x128xf32, #tpu.memory_space<vmem>>, vector<128x128xf32>,
    } else {
    }
    %c0 = arith.constant 0 : index
    %c0_1 = arith.constant 0 : index
    %3 = vector.load %arg4[%c0, %c0_1] : memref<128x128xbf16, #tpu.memory_space<vmem>>, vector<128x128xbf16>
    %c0_2 = arith.constant 0 : index
    %c0_3 = arith.constant 0 : index
    %4 = vector.load %arg5[%c0_2, %c0_3] : memref<128x128xbf16, #tpu.memory_space<vmem>>, vector<128x128xbf16>
    %cst = arith.constant dense<0.000000e+00> : vector<128x128xf32>
    %5 = tpu.matmul %3, %4, %cst {dimension_numbers = #tpu.dot_dimension_numbers<[1], [0], [0], [1], [0, 0, 1, 1], [], []>} : vector<128x128xbf16>, vector<128x128xbf16>, vector<128x128xf32> -> vector<128x128xf32>
    %c0_4 = arith.constant 0 : index
    %c0_5 = arith.constant 0 : index
    %6 = vector.load %arg8[%c0_4, %c0_5] : memref<128x128xf32, #tpu.memory_space<vmem>>, vector<128x128xf32>
    %c0_6 = arith.constant 0 : index
    %c0_7 = arith.constant 0 : index
    %7 = vector.load %arg3[%c0_6, %c0_7] : memref<128x128xbf16, #tpu.memory_space<vmem>>, vector<128x128xbf16>
    %8 = arith.truncf %5 : vector<128x128xf32> to vector<128x128xbf16>
    %cst_8 = arith.constant dense<0.000000e+00> : vector<128x128xf32>
    %9 = tpu.matmul %7, %8, %cst_8 {dimension_numbers = #tpu.dot_dimension_numbers<[1], [0], [0], [1], [0, 0, 1, 1], [], []>} : vector<128x128xbf16>, vector<128x128xbf16>, vector<128x128xf32> -> vector<128x128xf32>
    %10 = arith.addf %6, %9 : vector<128x128xf32>
    %c0_9 = arith.constant 0 : index
    %c0_10 = arith.constant 0 : index
    %11 = vector.load %arg8[%c0_9, %c0_10] : memref<128x128xf32, #tpu.memory_space<vmem>>, vector<128x128xf32>
    tpu.vector_store %arg8[%c0_9, %c0_10], %10 {strides = array<i32>} : memref<128x128xf32, #tpu.memory_space<vmem>>, vector<128x128xf32>,
    %c0_i32_11 = arith.constant 0 : i32
    %12 = arith.cmpi eq, %arg2, %c0_i32_11 : i32
    %13 = arith.extui %12 : i1 to i32
    %c0_i32_12 = arith.constant 0 : i32
    %14 = arith.cmpi ne, %13, %c0_i32_12 : i32
    scf.if %14 {
      %c0_13 = arith.constant 0 : index
      %c0_14 = arith.constant 0 : index
      %15 = vector.load %arg8[%c0_13, %c0_14] : memref<128x128xf32, #tpu.memory_space<vmem>>, vector<128x128xf32>
      %c0_15 = arith.constant 0 : index
      %c0_16 = arith.constant 0 : index
      %16 = vector.load %arg6[%c0_15, %c0_16] : memref<1x128xf32, #tpu.memory_space<vmem>>, vector<1x128xf32>
      %17 = vector.broadcast %16 : vector<1x128xf32> to vector<128x128xf32>
      %18 = arith.addf %15, %17 : vector<128x128xf32>
      %cst_17 = arith.constant 0.000000e+00 : f32
      %19 = vector.broadcast %cst_17 : f32 to vector<128x128xf32>
      %20 = arith.maximumf %18, %19 : vector<128x128xf32>
      %c0_18 = arith.constant 0 : index
      %c0_19 = arith.constant 0 : index
      %21 = vector.load %arg7[%c0_18, %c0_19] : memref<128x128xf32, #tpu.memory_space<vmem>>, vector<128x128xf32>
      tpu.vector_store %arg7[%c0_18, %c0_19], %20 {strides = array<i32>} : memref<128x128xf32, #tpu.memory_space<vmem>>, vector<128x128xf32>,
    } else {
    }
    return
  }
  func.func @transform_0(%arg0: i32, %arg1: i32, %arg2: i32) -> (i32, i32) {
    %c0_i32 = arith.constant 0 : i32
    return %arg0, %arg2 : i32, i32
  }
  func.func @transform_1(%arg0: i32, %arg1: i32, %arg2: i32) -> (i32, i32) {
    %c0_i32 = arith.constant 0 : i32
    %c0_i32_0 = arith.constant 0 : i32
    return %arg2, %c0_i32 : i32, i32
  }
  func.func @transform_2(%arg0: i32, %arg1: i32, %arg2: i32) -> (i32, i32) {
    %c0_i32 = arith.constant 0 : i32
    %c0_i32_0 = arith.constant 0 : i32
    return %c0_i32, %arg1 : i32, i32
  }
  func.func @transform_3(%arg0: i32, %arg1: i32, %arg2: i32) -> (i32, i32) {
    %c0_i32 = arith.constant 0 : i32
    %c0_i32_0 = arith.constant 0 : i32
    return %c0_i32, %arg1 : i32, i32
  }
  func.func @transform_4(%arg0: i32, %arg1: i32, %arg2: i32) -> (i32, i32) {
    %c0_i32 = arith.constant 0 : i32
    return %arg0, %arg1 : i32, i32
  }
}

module attributes {stable_mosaic.version = 11 : i64} {
  func.func @_head_kernel(%arg0: i32, %arg1: memref<8x128xf32, #tpu.memory_space<vmem>>, %arg2: memref<128x128xf32, #tpu.memory_space<vmem>>, %arg3: memref<128x128xf32, #tpu.memory_space<vmem>>, %arg4: memref<1x128xf32, #tpu.memory_space<vmem>>, %arg5: memref<128x128xf32, #tpu.memory_space<vmem>>, %arg6: memref<1x128xf32, #tpu.memory_space<vmem>>, %arg7: memref<8x128xf32, #tpu.memory_space<vmem>>, %arg8: memref<8x128xf32, #tpu.memory_space<vmem>>) attributes {dimension_semantics = [#tpu.dimension_semantics<arbitrary>], iteration_bounds = array<i64: 1>, scalar_prefetch = 0 : i64, scratch_operands = 1 : i64, tpu.core_type = #tpu.core_type<tc>, window_params = [{transform_indices = @transform_0, window_bounds = array<i64: 8, 128>}, {transform_indices = @transform_1, window_bounds = array<i64: 128, 128>}, {pipeline_mode = #tpu.pipeline_mode<synchronous>, transform_indices = @transform_2, window_bounds = array<i64: 128, 128>}, {pipeline_mode = #tpu.pipeline_mode<synchronous>, transform_indices = @transform_3, window_bounds = array<i64: 1, 128>}, {pipeline_mode = #tpu.pipeline_mode<synchronous>, transform_indices = @transform_4, window_bounds = array<i64: 128, 128>}, {pipeline_mode = #tpu.pipeline_mode<synchronous>, transform_indices = @transform_5, window_bounds = array<i64: 1, 128>}, {pipeline_mode = #tpu.pipeline_mode<synchronous>, transform_indices = @transform_6, window_bounds = array<i64: 8, 128>}]} {
    %c0_i32 = arith.constant 0 : i32
    %0 = arith.cmpi eq, %arg0, %c0_i32 : i32
    %1 = arith.extui %0 : i1 to i32
    %c0_i32_0 = arith.constant 0 : i32
    %2 = arith.cmpi ne, %1, %c0_i32_0 : i32
    scf.if %2 {
      %cst_10 = arith.constant 0.000000e+00 : f32
      %12 = vector.broadcast %cst_10 : f32 to vector<8x128xf32>
      %c0_11 = arith.constant 0 : index
      %c0_12 = arith.constant 0 : index
      %13 = vector.load %arg8[%c0_11, %c0_12] : memref<8x128xf32, #tpu.memory_space<vmem>>, vector<8x128xf32>
      tpu.vector_store %arg8[%c0_11, %c0_12], %12 {strides = array<i32>} : memref<8x128xf32, #tpu.memory_space<vmem>>, vector<8x128xf32>,
    } else {
    }
    %c0 = arith.constant 0 : index
    %c0_1 = arith.constant 0 : index
    %3 = vector.load %arg8[%c0, %c0_1] : memref<8x128xf32, #tpu.memory_space<vmem>>, vector<8x128xf32>
    %c0_2 = arith.constant 0 : index
    %c0_3 = arith.constant 0 : index
    %4 = vector.load %arg1[%c0_2, %c0_3] : memref<8x128xf32, #tpu.memory_space<vmem>>, vector<8x128xf32>
    %c0_4 = arith.constant 0 : index
    %c0_5 = arith.constant 0 : index
    %5 = vector.load %arg2[%c0_4, %c0_5] : memref<128x128xf32, #tpu.memory_space<vmem>>, vector<128x128xf32>
    %cst = arith.constant dense<0.000000e+00> : vector<8x128xf32>
    %6 = tpu.matmul %4, %5, %cst {dimension_numbers = #tpu.dot_dimension_numbers<[1], [0], [0], [1], [0, 0, 1, 1], [], []>} : vector<8x128xf32>, vector<128x128xf32>, vector<8x128xf32> -> vector<8x128xf32>
    %7 = arith.addf %3, %6 : vector<8x128xf32>
    %c0_6 = arith.constant 0 : index
    %c0_7 = arith.constant 0 : index
    %8 = vector.load %arg8[%c0_6, %c0_7] : memref<8x128xf32, #tpu.memory_space<vmem>>, vector<8x128xf32>
    tpu.vector_store %arg8[%c0_6, %c0_7], %7 {strides = array<i32>} : memref<8x128xf32, #tpu.memory_space<vmem>>, vector<8x128xf32>,
    %c0_i32_8 = arith.constant 0 : i32
    %9 = arith.cmpi eq, %arg0, %c0_i32_8 : i32
    %10 = arith.extui %9 : i1 to i32
    %c0_i32_9 = arith.constant 0 : i32
    %11 = arith.cmpi ne, %10, %c0_i32_9 : i32
    scf.if %11 {
      %c0_10 = arith.constant 0 : index
      %c0_11 = arith.constant 0 : index
      %12 = vector.load %arg8[%c0_10, %c0_11] : memref<8x128xf32, #tpu.memory_space<vmem>>, vector<8x128xf32>
      %c0_12 = arith.constant 0 : index
      %c0_13 = arith.constant 0 : index
      %13 = vector.load %arg3[%c0_12, %c0_13] : memref<128x128xf32, #tpu.memory_space<vmem>>, vector<128x128xf32>
      %cst_14 = arith.constant dense<0.000000e+00> : vector<8x128xf32>
      %14 = tpu.matmul %12, %13, %cst_14 {dimension_numbers = #tpu.dot_dimension_numbers<[1], [0], [0], [1], [0, 0, 1, 1], [], []>} : vector<8x128xf32>, vector<128x128xf32>, vector<8x128xf32> -> vector<8x128xf32>
      %c0_15 = arith.constant 0 : index
      %c0_16 = arith.constant 0 : index
      %15 = vector.load %arg4[%c0_15, %c0_16] : memref<1x128xf32, #tpu.memory_space<vmem>>, vector<1x128xf32>
      %16 = vector.broadcast %15 : vector<1x128xf32> to vector<8x128xf32>
      %17 = arith.addf %14, %16 : vector<8x128xf32>
      %cst_17 = arith.constant 0.000000e+00 : f32
      %18 = vector.broadcast %cst_17 : f32 to vector<8x128xf32>
      %19 = arith.maximumf %17, %18 : vector<8x128xf32>
      %c0_18 = arith.constant 0 : index
      %c0_19 = arith.constant 0 : index
      %20 = vector.load %arg5[%c0_18, %c0_19] : memref<128x128xf32, #tpu.memory_space<vmem>>, vector<128x128xf32>
      %cst_20 = arith.constant dense<0.000000e+00> : vector<8x128xf32>
      %21 = tpu.matmul %19, %20, %cst_20 {dimension_numbers = #tpu.dot_dimension_numbers<[1], [0], [0], [1], [0, 0, 1, 1], [], []>} : vector<8x128xf32>, vector<128x128xf32>, vector<8x128xf32> -> vector<8x128xf32>
      %c0_21 = arith.constant 0 : index
      %c0_22 = arith.constant 0 : index
      %22 = vector.load %arg6[%c0_21, %c0_22] : memref<1x128xf32, #tpu.memory_space<vmem>>, vector<1x128xf32>
      %23 = vector.broadcast %22 : vector<1x128xf32> to vector<8x128xf32>
      %24 = arith.addf %21, %23 : vector<8x128xf32>
      %25 = tpu.iota {dimensions = array<i32: 1>} : vector<8x128xi32>
      %c4_i32 = arith.constant 4 : i32
      %26 = vector.broadcast %c4_i32 : i32 to vector<8x128xi32>
      %27 = arith.cmpi slt, %25, %26 : vector<8x128xi32>
      %cst_23 = arith.constant -1.000000e+30 : f32
      %28 = vector.broadcast %cst_23 : f32 to vector<8x128xf32>
      %29 = arith.select %27, %24, %28 : vector<8x128xi1>, vector<8x128xf32>
      %cst_24 = arith.constant dense<0xFF800000> : vector<8xf32>
      %30 = vector.multi_reduction <maximumf>, %29, %cst_24 [1] : vector<8x128xf32> to vector<8xf32>
      %31 = vector.shape_cast %30 : vector<8xf32> to vector<8x1xf32>
      %32 = vector.broadcast %31 : vector<8x1xf32> to vector<8x128xf32>
      %33 = arith.subf %29, %32 : vector<8x128xf32>
      %34 = math.exp %33 : vector<8x128xf32>
      %cst_25 = arith.constant dense<0.000000e+00> : vector<8xf32>
      %35 = vector.multi_reduction <add>, %34, %cst_25 [1] : vector<8x128xf32> to vector<8xf32>
      %36 = vector.shape_cast %35 : vector<8xf32> to vector<8x1xf32>
      %37 = math.log %36 : vector<8x1xf32>
      %38 = vector.broadcast %37 : vector<8x1xf32> to vector<8x128xf32>
      %39 = arith.subf %33, %38 : vector<8x128xf32>
      %c0_26 = arith.constant 0 : index
      %c0_27 = arith.constant 0 : index
      %40 = vector.load %arg7[%c0_26, %c0_27] : memref<8x128xf32, #tpu.memory_space<vmem>>, vector<8x128xf32>
      tpu.vector_store %arg7[%c0_26, %c0_27], %39 {strides = array<i32>} : memref<8x128xf32, #tpu.memory_space<vmem>>, vector<8x128xf32>,
    } else {
    }
    return
  }
  func.func @transform_0(%arg0: i32) -> (i32, i32) {
    %c0_i32 = arith.constant 0 : i32
    %c0_i32_0 = arith.constant 0 : i32
    return %c0_i32, %arg0 : i32, i32
  }
  func.func @transform_1(%arg0: i32) -> (i32, i32) {
    %c0_i32 = arith.constant 0 : i32
    %c0_i32_0 = arith.constant 0 : i32
    return %arg0, %c0_i32 : i32, i32
  }
  func.func @transform_2(%arg0: i32) -> (i32, i32) {
    %c0_i32 = arith.constant 0 : i32
    %c0_i32_0 = arith.constant 0 : i32
    %c0_i32_1 = arith.constant 0 : i32
    return %c0_i32, %c0_i32_0 : i32, i32
  }
  func.func @transform_3(%arg0: i32) -> (i32, i32) {
    %c0_i32 = arith.constant 0 : i32
    %c0_i32_0 = arith.constant 0 : i32
    %c0_i32_1 = arith.constant 0 : i32
    return %c0_i32, %c0_i32_0 : i32, i32
  }
  func.func @transform_4(%arg0: i32) -> (i32, i32) {
    %c0_i32 = arith.constant 0 : i32
    %c0_i32_0 = arith.constant 0 : i32
    %c0_i32_1 = arith.constant 0 : i32
    return %c0_i32, %c0_i32_0 : i32, i32
  }
  func.func @transform_5(%arg0: i32) -> (i32, i32) {
    %c0_i32 = arith.constant 0 : i32
    %c0_i32_0 = arith.constant 0 : i32
    %c0_i32_1 = arith.constant 0 : i32
    return %c0_i32, %c0_i32_0 : i32, i32
  }
  func.func @transform_6(%arg0: i32) -> (i32, i32) {
    %c0_i32 = arith.constant 0 : i32
    %c0_i32_0 = arith.constant 0 : i32
    %c0_i32_1 = arith.constant 0 : i32
    return %c0_i32, %c0_i32_0 : i32, i32
  }
}

</mosaic_0001>

<llo_original>
// kernel: mul.4
$region0: #{mul.4}
  #allocation0 [shape = 's32[1]{0}', space=sflag, size = 0x4, scoped, tag = 'scoped memory for mul.4']
  %s0 = inlined_call_operand.vmem [shape: f32[64], index: 0, kind: input, shape index: {}]
  %s1 = inlined_call_operand.vmem [shape: f32[64], index: 1, kind: input, shape index: {}]
  %s2 = inlined_call_operand.vmem [shape: f32[64], index: 2, kind: output, shape index: {}]
  %v3 = vld [vmem:[%s0] sm:$0x1]
  %v4 = vld [vmem:[%s1] sm:$0x1]
  %5 = xla_tuple %v3, %v4
  %6 = xla_tuple %5
  %v7 = vmul.f32 %v3, %v4
  %8 = xla_tuple %v7
  %9 = vst [vmem:[%s2] sm:$0x1] %v7

// kernel: _device_forward.5
$region0: #{_device_forward.5}
  #allocation0 [shape = 'u32[]', space=smem, size = 0x4, offset = 0x4, fixed_abs, tag = 'smem constant byte address 0x4 - core index']
  #allocation1 [shape = 'u32[144,128]{1,0:T(1,128)}', space=vmem, size = 0x12000, scoped, tag = 'internal scratch']
  #allocation2 [shape = 'f32[128,128]{1,0:T(8,128)}', space=vmem, size = 0x10000, scoped, tag = 'scratch operand']
  %s0 = inlined_call_operand.vmem [shape: bf16[128,128], index: 0, kind: input, shape index: {}]
  %s1 = inlined_call_operand.vmem [shape: bf16[128,128], index: 1, kind: input, shape index: {}]
  %s2 = inlined_call_operand.vmem [shape: bf16[128,128], index: 2, kind: input, shape index: {}]
  %s3 = inlined_call_operand.vmem [shape: f32[1,128], index: 3, kind: input, shape index: {}]
  %s4 = inlined_call_operand.vmem [shape: bf16[128,128], index: 4, kind: output, shape index: {}]
  %s5 = sld [smem:[#allocation0]]
  $region34: #{_device_forward.5} parent=0
    _
  %s7 = ssub.s32 1, %s5
  %s8 = scalar_select 0, %s7, %s5
  // Predicated region
  $region2: #{_device_forward.5} parent=0 // pred_check
    _
  $region3: #{_device_forward.5} parent=0 // pred_check_branch
    %10 = sbr.rel (0) target = $region5
  $region4: #{_device_forward.5} parent=0 // pred_region
    _
  $region5: #{_device_forward.5} parent=0 // pred_fallthru
    _
  // Predicated region
  $region6: #{_device_forward.5} parent=0 // pred_check
    _
  $region7: #{_device_forward.5} parent=0 // pred_check_branch
    %12 = sbr.rel (0) target = $region9
  $region8: #{_device_forward.5} parent=0 // pred_region
    _
  $region9: #{_device_forward.5} parent=0 // pred_fallthru
    _
  // Predicated region
  $region10: #{_device_forward.5} parent=0 // pred_check
    _
  $region11: #{_device_forward.5} parent=0 // pred_check_branch
    %14 = sbr.rel (0) target = $region13
  $region12: #{_device_forward.5} parent=0 // pred_region
    _
  $region13: #{_device_forward.5} parent=0 // pred_fallthru
    _
  // Predicated region
  $region14: #{_device_forward.5} parent=0 // pred_check
    _
  $region15: #{_device_forward.5} parent=0 // pred_check_branch
    %16 = sbr.rel (0) target = $region17
  $region16: #{_device_forward.5} parent=0 // pred_region
    _
  $region17: #{_device_forward.5} parent=0 // pred_fallthru
    _
  %p18 = scmp.eq.s32.totalorder 0, 0
  // Predicated region
  $region18: #{_device_forward.5} parent=0 // pred_check
    %p19 = pneg %p18
  $region19: #{_device_forward.5} parent=0 // pred_check_branch
    %21 = sbr.rel (%p19) target = $region21
  $region20: #{_device_forward.5} parent=0 // pred_region
    %22 = vst [vmem:[#allocation2] sm:$0xff] 0.0
    %23 = vst [vmem:[#allocation2 + $0x8] sm:$0xff] 0.0
    %24 = vst [vmem:[#allocation2 + $0x10] sm:$0xff] 0.0
    %25 = vst [vmem:[#allocation2 + $0x18] sm:$0xff] 0.0
    %26 = vst [vmem:[#allocation2 + $0x20] sm:$0xff] 0.0
    %27 = vst [vmem:[#allocation2 + $0x28] sm:$0xff] 0.0
    %28 = vst [vmem:[#allocation2 + $0x30] sm:$0xff] 0.0
    %29 = vst [vmem:[#allocation2 + $0x38] sm:$0xff] 0.0
    %30 = vst [vmem:[#allocation2 + $0x40] sm:$0xff] 0.0
    %31 = vst [vmem:[#allocation2 + $0x48] sm:$0xff] 0.0
    %32 = vst [vmem:[#allocation2 + $0x50] sm:$0xff] 0.0
    %33 = vst [vmem:[#allocation2 + $0x58] sm:$0xff] 0.0
    %34 = vst [vmem:[#allocation2 + $0x60] sm:$0xff] 0.0
    %35 = vst [vmem:[#allocation2 + $0x68] sm:$0xff] 0.0
    %36 = vst [vmem:[#allocation2 + $0x70] sm:$0xff] 0.0
    %37 = vst [vmem:[#allocation2 + $0x78] sm:$0xff] 0.0
  $region21: #{_device_forward.5} parent=0 // pred_fallthru
    _
  %v38 = vld [vmem:[%s1] sm:$0xf]
  %v39 = vld [vmem:[%s1 + $0x4] sm:$0xf]
  %v40 = vld [vmem:[%s1 + $0x8] sm:$0xf]
  %v41 = vld [vmem:[%s1 + $0xc] sm:$0xf]
  %v42 = vld [vmem:[%s1 + $0x10] sm:$0xf]
  %v43 = vld [vmem:[%s1 + $0x14] sm:$0xf]
  %v44 = vld [vmem:[%s1 + $0x18] sm:$0xf]
  %v45 = vld [vmem:[%s1 + $0x1c] sm:$0xf]
  %v46 = vld [vmem:[%s1 + $0x20] sm:$0xf]
  %v47 = vld [vmem:[%s1 + $0x24] sm:$0xf]
  %v48 = vld [vmem:[%s1 + $0x28] sm:$0xf]
  %v49 = vld [vmem:[%s1 + $0x2c] sm:$0xf]
  %v50 = vld [vmem:[%s1 + $0x30] sm:$0xf]
  %v51 = vld [vmem:[%s1 + $0x34] sm:$0xf]
  %v52 = vld [vmem:[%s1 + $0x38] sm:$0xf]
  %v53 = vld [vmem:[%s1 + $0x3c] sm:$0xf]
  %v54 = vld [vmem:[%s2] sm:$0xf]
  %v55 = vld [vmem:[%s2 + $0x4] sm:$0xf]
  %v56 = vld [vmem:[%s2 + $0x8] sm:$0xf]
  %v57 = vld [vmem:[%s2 + $0xc] sm:$0xf]
  %v58 = vld [vmem:[%s2 + $0x10] sm:$0xf]
  %v59 = vld [vmem:[%s2 + $0x14] sm:$0xf]
  %v60 = vld [vmem:[%s2 + $0x18] sm:$0xf]
  %v61 = vld [vmem:[%s2 + $0x1c] sm:$0xf]
  %v62 = vld [vmem:[%s2 + $0x20] sm:$0xf]
  %v63 = vld [vmem:[%s2 + $0x24] sm:$0xf]
  %v64 = vld [vmem:[%s2 + $0x28] sm:$0xf]
  %v65 = vld [vmem:[%s2 + $0x2c] sm:$0xf]
  %v66 = vld [vmem:[%s2 + $0x30] sm:$0xf]
  %v67 = vld [vmem:[%s2 + $0x34] sm:$0xf]
  %v68 = vld [vmem:[%s2 + $0x38] sm:$0xf]
  %v69 = vld [vmem:[%s2 + $0x3c] sm:$0xf]
  %v86 = vunpack.c.l.b16 %v38
  %v87 = vunpack.c.l.b16 %v39
  %v88 = vunpack.c.l.b16 %v40
  %v89 = vunpack.c.l.b16 %v41
  %v90 = vunpack.c.l.b16 %v42
  %v91 = vunpack.c.l.b16 %v43
  %v92 = vunpack.c.l.b16 %v44
  %v93 = vunpack.c.l.b16 %v45
  %v94 = vunpack.c.l.b16 %v46
  %v95 = vunpack.c.l.b16 %v47
  %v96 = vunpack.c.l.b16 %v48
  %v97 = vunpack.c.l.b16 %v49
  %v98 = vunpack.c.l.b16 %v50
  %v99 = vunpack.c.l.b16 %v51
  %v100 = vunpack.c.l.b16 %v52
  %v101 = vunpack.c.l.b16 %v53
  %v102 = vpack.c.b16 %v87, %v86
  %v103 = vpack.c.b16 %v89, %v88
  %v104 = vpack.c.b16 %v91, %v90
  %v105 = vpack.c.b16 %v93, %v92
  %v106 = vpack.c.b16 %v95, %v94
  %v107 = vpack.c.b16 %v97, %v96
  %v108 = vpack.c.b16 %v99, %v98
  %v109 = vpack.c.b16 %v101, %v100
  %v134 = vunpack.c.l.b16 %v54
  %v135 = vunpack.c.l.b16 %v55
  %v136 = vunpack.c.l.b16 %v56
  %v137 = vunpack.c.l.b16 %v57
  %v138 = vunpack.c.l.b16 %v58
  %v139 = vunpack.c.l.b16 %v59
  %v140 = vunpack.c.l.b16 %v60
  %v141 = vunpack.c.l.b16 %v61
  %v142 = vunpack.c.l.b16 %v62
  %v143 = vunpack.c.l.b16 %v63
  %v144 = vunpack.c.l.b16 %v64
  %v145 = vunpack.c.l.b16 %v65
  %v146 = vunpack.c.l.b16 %v66
  %v147 = vunpack.c.l.b16 %v67
  %v148 = vunpack.c.l.b16 %v68
  %v149 = vunpack.c.l.b16 %v69
  %v150 = vpack.c.b16 %v135, %v134
  %v151 = vpack.c.b16 %v137, %v136
  %v152 = vpack.c.b16 %v139, %v138
  %v153 = vpack.c.b16 %v141, %v140
  %v154 = vpack.c.b16 %v143, %v142
  %v155 = vpack.c.b16 %v145, %v144
  %v156 = vpack.c.b16 %v147, %v146
  %v157 = vpack.c.b16 %v149, %v148
  %166 = vmatprep.subr.bf16.mxu0 0
  %167 = vmatpush1.bf16.msra.mxu0 %v150
  %168 = vmatprep.subr.bf16.mxu0 0
  %169 = vmatpush1.bf16.msra.mxu0 %v151
  %170 = vmatprep.subr.bf16.mxu0 0
  %171 = vmatpush1.bf16.msra.mxu0 %v152
  %172 = vmatprep.subr.bf16.mxu0 0
  %173 = vmatpush1.bf16.msra.mxu0 %v153
  %174 = vmatprep.subr.bf16.mxu0 0
  %175 = vmatpush1.bf16.msra.mxu0 %v154
  %176 = vmatprep.subr.bf16.mxu0 0
  %177 = vmatpush1.bf16.msra.mxu0 %v155
  %178 = vmatprep.subr.bf16.mxu0 0
  %179 = vmatpush1.bf16.msra.mxu0 %v156
  %180 = vmatprep.subr.bf16.mxu0 0
  %181 = vmatpush1.bf16.msra.mxu0 %v157
  %182 = vmatprep.subr.bf16.mxu0 0
  %183 = vmatpush1.bf16.msra.mxu0 0
  %184 = vmatprep.subr.bf16.mxu0 0
  %185 = vmatpush1.bf16.msra.mxu0 0
  %186 = vmatprep.subr.bf16.mxu0 0
  %187 = vmatpush1.bf16.msra.mxu0 0
  %188 = vmatprep.subr.bf16.mxu0 0
  %189 = vmatpush1.bf16.msra.mxu0 0
  %190 = vmatprep.subr.bf16.mxu0 0
  %191 = vmatpush1.bf16.msra.mxu0 0
  %192 = vmatprep.subr.bf16.mxu0 0
  %193 = vmatpush1.bf16.msra.mxu0 0
  %194 = vmatprep.subr.bf16.mxu0 0
  %195 = vmatpush1.bf16.msra.mxu0 0
  %196 = vmatprep.subr.bf16.mxu0 0
  %197 = vmatpush1.bf16.msra.mxu0 0
  %198 = vmatprep.mubr.bf16.mxu0 0
  %199 = vmatmul.mubr.bf16.gmra.mrb[0].mxu0 %v102
  %v200 = vpop.f32.mrb[0].mxu0
  %v201 = vadd.f32 0.0, %v200
  %v202 = vpop.f32.mrb[0].mxu0
  %v203 = vpop.f32.mrb[0].mxu0
  %v204 = vadd.f32 0.0, %v203
  %v205 = vpop.f32.mrb[0].mxu0
  %206 = vmatprep.mubr.bf16.mxu0 0
  %207 = vmatmul.mubr.bf16.gmra.mrb[0].mxu0 %v103
  %v208 = vpop.f32.mrb[0].mxu0
  %v209 = vadd.f32 0.0, %v208
  %v210 = vpop.f32.mrb[0].mxu0
  %v211 = vpop.f32.mrb[0].mxu0
  %v212 = vadd.f32 0.0, %v211
  %v213 = vpop.f32.mrb[0].mxu0
  %214 = vmatprep.mubr.bf16.mxu0 0
  %215 = vmatmul.mubr.bf16.gmra.mrb[0].mxu0 %v104
  %v216 = vpop.f32.mrb[0].mxu0
  %v217 = vadd.f32 0.0, %v216
  %v218 = vpop.f32.mrb[0].mxu0
  %v219 = vpop.f32.mrb[0].mxu0
  %v220 = vadd.f32 0.0, %v219
  %v221 = vpop.f32.mrb[0].mxu0
  %222 = vmatprep.mubr.bf16.mxu0 0
  %223 = vmatmul.mubr.bf16.gmra.mrb[0].mxu0 %v105
  %v224 = vpop.f32.mrb[0].mxu0
  %v225 = vadd.f32 0.0, %v224
  %v226 = vpop.f32.mrb[0].mxu0
  %v227 = vpop.f32.mrb[0].mxu0
  %v228 = vadd.f32 0.0, %v227
  %v229 = vpop.f32.mrb[0].mxu0
  %230 = vmatprep.mubr.bf16.mxu0 0
  %231 = vmatmul.mubr.bf16.gmra.mrb[0].mxu0 %v106
  %v232 = vpop.f32.mrb[0].mxu0
  %v233 = vadd.f32 0.0, %v232
  %v234 = vpop.f32.mrb[0].mxu0
  %v235 = vpop.f32.mrb[0].mxu0
  %v236 = vadd.f32 0.0, %v235
  %v237 = vpop.f32.mrb[0].mxu0
  %238 = vmatprep.mubr.bf16.mxu0 0
  %239 = vmatmul.mubr.bf16.gmra.mrb[0].mxu0 %v107
  %v240 = vpop.f32.mrb[0].mxu0
  %v241 = vadd.f32 0.0, %v240
  %v242 = vpop.f32.mrb[0].mxu0
  %v243 = vpop.f32.mrb[0].mxu0
  %v244 = vadd.f32 0.0, %v243
  %v245 = vpop.f32.mrb[0].mxu0
  %246 = vmatprep.mubr.bf16.mxu0 0
  %247 = vmatmul.mubr.bf16.gmra.mrb[0].mxu0 %v108
  %v248 = vpop.f32.mrb[0].mxu0
  %v249 = vadd.f32 0.0, %v248
  %v250 = vpop.f32.mrb[0].mxu0
  %v251 = vpop.f32.mrb[0].mxu0
  %v252 = vadd.f32 0.0, %v251
  %v253 = vpop.f32.mrb[0].mxu0
  %254 = vmatprep.mubr.bf16.mxu0 0
  %255 = vmatmul.mubr.bf16.gmra.mrb[0].mxu0 %v109
  %v256 = vpop.f32.mrb[0].mxu0
  %v257 = vadd.f32 0.0, %v256
  %v258 = vpop.f32.mrb[0].mxu0
  %v259 = vpop.f32.mrb[0].mxu0
  %v260 = vadd.f32 0.0, %v259
  %v261 = vpop.f32.mrb[0].mxu0
  %262 = vdwg.mxu0
  %v263 = vld [vmem:[#allocation2] sm:$0xff]
  %v264 = vld [vmem:[#allocation2 + $0x8] sm:$0xff]
  %v265 = vld [vmem:[#allocation2 + $0x10] sm:$0xff]
  %v266 = vld [vmem:[#allocation2 + $0x18] sm:$0xff]
  %v267 = vld [vmem:[#allocation2 + $0x20] sm:$0xff]
  %v268 = vld [vmem:[#allocation2 + $0x28] sm:$0xff]
  %v269 = vld [vmem:[#allocation2 + $0x30] sm:$0xff]
  %v270 = vld [vmem:[#allocation2 + $0x38] sm:$0xff]
  %v271 = vld [vmem:[#allocation2 + $0x40] sm:$0xff]
  %v272 = vld [vmem:[#allocation2 + $0x48] sm:$0xff]
  %v273 = vld [vmem:[#allocation2 + $0x50] sm:$0xff]
  %v274 = vld [vmem:[#allocation2 + $0x58] sm:$0xff]
  %v275 = vld [vmem:[#allocation2 + $0x60] sm:$0xff]
  %v276 = vld [vmem:[#allocation2 + $0x68] sm:$0xff]
  %v277 = vld [vmem:[#allocation2 + $0x70] sm:$0xff]
  %v278 = vld [vmem:[#allocation2 + $0x78] sm:$0xff]
  %v279 = vld [vmem:[%s0] sm:$0xf]
  %v280 = vld [vmem:[%s0 + $0x4] sm:$0xf]
  %v281 = vld [vmem:[%s0 + $0x8] sm:$0xf]
  %v282 = vld [vmem:[%s0 + $0xc] sm:$0xf]
  %v283 = vld [vmem:[%s0 + $0x10] sm:$0xf]
  %v284 = vld [vmem:[%s0 + $0x14] sm:$0xf]
  %v285 = vld [vmem:[%s0 + $0x18] sm:$0xf]
  %v286 = vld [vmem:[%s0 + $0x1c] sm:$0xf]
  %v287 = vld [vmem:[%s0 + $0x20] sm:$0xf]
  %v288 = vld [vmem:[%s0 + $0x24] sm:$0xf]
  %v289 = vld [vmem:[%s0 + $0x28] sm:$0xf]
  %v290 = vld [vmem:[%s0 + $0x2c] sm:$0xf]
  %v291 = vld [vmem:[%s0 + $0x30] sm:$0xf]
  %v292 = vld [vmem:[%s0 + $0x34] sm:$0xf]
  %v293 = vld [vmem:[%s0 + $0x38] sm:$0xf]
  %v294 = vld [vmem:[%s0 + $0x3c] sm:$0xf]
  %v295 = vpack.c.bf16 %v204, %v201
  %v296 = vpack.c.bf16 %v212, %v209
  %v297 = vpack.c.bf16 %v220, %v217
  %v298 = vpack.c.bf16 %v228, %v225
  %v299 = vpack.c.bf16 %v236, %v233
  %v300 = vpack.c.bf16 %v244, %v241
  %v301 = vpack.c.bf16 %v252, %v249
  %v302 = vpack.c.bf16 %v260, %v257
  %v319 = vunpack.c.l.b16 %v279
  %v320 = vunpack.c.l.b16 %v280
  %v321 = vunpack.c.l.b16 %v281
  %v322 = vunpack.c.l.b16 %v282
  %v323 = vunpack.c.l.b16 %v283
  %v324 = vunpack.c.l.b16 %v284
  %v325 = vunpack.c.l.b16 %v285
  %v326 = vunpack.c.l.b16 %v286
  %v327 = vunpack.c.l.b16 %v287
  %v328 = vunpack.c.l.b16 %v288
  %v329 = vunpack.c.l.b16 %v289
  %v330 = vunpack.c.l.b16 %v290
  %v331 = vunpack.c.l.b16 %v291
  %v332 = vunpack.c.l.b16 %v292
  %v333 = vunpack.c.l.b16 %v293
  %v334 = vunpack.c.l.b16 %v294
  %v335 = vpack.c.b16 %v320, %v319
  %v336 = vpack.c.b16 %v322, %v321
  %v337 = vpack.c.b16 %v324, %v323
  %v338 = vpack.c.b16 %v326, %v325
  %v339 = vpack.c.b16 %v328, %v327
  %v340 = vpack.c.b16 %v330, %v329
  %v341 = vpack.c.b16 %v332, %v331
  %v342 = vpack.c.b16 %v334, %v333
  %351 = vmatprep.subr.bf16.mxu0 0
  %352 = vmatpush1.bf16.msra.mxu0 %v295
  %353 = vmatprep.subr.bf16.mxu0 0
  %354 = vmatpush1.bf16.msra.mxu0 %v296
  %355 = vmatprep.subr.bf16.mxu0 0
  %356 = vmatpush1.bf16.msra.mxu0 %v297
  %357 = vmatprep.subr.bf16.mxu0 0
  %358 = vmatpush1.bf16.msra.mxu0 %v298
  %359 = vmatprep.subr.bf16.mxu0 0
  %360 = vmatpush1.bf16.msra.mxu0 %v299
  %361 = vmatprep.subr.bf16.mxu0 0
  %362 = vmatpush1.bf16.msra.mxu0 %v300
  %363 = vmatprep.subr.bf16.mxu0 0
  %364 = vmatpush1.bf16.msra.mxu0 %v301
  %365 = vmatprep.subr.bf16.mxu0 0
  %366 = vmatpush1.bf16.msra.mxu0 %v302
  %367 = vmatprep.subr.bf16.mxu0 0
  %368 = vmatpush1.bf16.msra.mxu0 0
  %369 = vmatprep.subr.bf16.mxu0 0
  %370 = vmatpush1.bf16.msra.mxu0 0
  %371 = vmatprep.subr.bf16.mxu0 0
  %372 = vmatpush1.bf16.msra.mxu0 0
  %373 = vmatprep.subr.bf16.mxu0 0
  %374 = vmatpush1.bf16.msra.mxu0 0
  %375 = vmatprep.subr.bf16.mxu0 0
  %376 = vmatpush1.bf16.msra.mxu0 0
  %377 = vmatprep.subr.bf16.mxu0 0
  %378 = vmatpush1.bf16.msra.mxu0 0
  %379 = vmatprep.subr.bf16.mxu0 0
  %380 = vmatpush1.bf16.msra.mxu0 0
  %381 = vmatprep.subr.bf16.mxu0 0
  %382 = vmatpush1.bf16.msra.mxu0 0
  %383 = vmatprep.mubr.bf16.mxu0 0
  %384 = vmatmul.mubr.bf16.gmra.mrb[0].mxu0 %v335
  %v385 = vpop.f32.mrb[0].mxu0
  %v386 = vadd.f32 0.0, %v385
  %v387 = vpop.f32.mrb[0].mxu0
  %v388 = vpop.f32.mrb[0].mxu0
  %v389 = vadd.f32 0.0, %v388
  %v390 = vpop.f32.mrb[0].mxu0
  %391 = vmatprep.mubr.bf16.mxu0 0
  %392 = vmatmul.mubr.bf16.gmra.mrb[0].mxu0 %v336
  %v393 = vpop.f32.mrb[0].mxu0
  %v394 = vadd.f32 0.0, %v393
  %v395 = vpop.f32.mrb[0].mxu0
  %v396 = vpop.f32.mrb[0].mxu0
  %v397 = vadd.f32 0.0, %v396
  %v398 = vpop.f32.mrb[0].mxu0
  %399 = vmatprep.mubr.bf16.mxu0 0
  %400 = vmatmul.mubr.bf16.gmra.mrb[0].mxu0 %v337
  %v401 = vpop.f32.mrb[0].mxu0
  %v402 = vadd.f32 0.0, %v401
  %v403 = vpop.f32.mrb[0].mxu0
  %v404 = vpop.f32.mrb[0].mxu0
  %v405 = vadd.f32 0.0, %v404
  %v406 = vpop.f32.mrb[0].mxu0
  %407 = vmatprep.mubr.bf16.mxu0 0
  %408 = vmatmul.mubr.bf16.gmra.mrb[0].mxu0 %v338
  %v409 = vpop.f32.mrb[0].mxu0
  %v410 = vadd.f32 0.0, %v409
  %v411 = vpop.f32.mrb[0].mxu0
  %v412 = vpop.f32.mrb[0].mxu0
  %v413 = vadd.f32 0.0, %v412
  %v414 = vpop.f32.mrb[0].mxu0
  %415 = vmatprep.mubr.bf16.mxu0 0
  %416 = vmatmul.mubr.bf16.gmra.mrb[0].mxu0 %v339
  %v417 = vpop.f32.mrb[0].mxu0
  %v418 = vadd.f32 0.0, %v417
  %v419 = vpop.f32.mrb[0].mxu0
  %v420 = vpop.f32.mrb[0].mxu0
  %v421 = vadd.f32 0.0, %v420
  %v422 = vpop.f32.mrb[0].mxu0
  %423 = vmatprep.mubr.bf16.mxu0 0
  %424 = vmatmul.mubr.bf16.gmra.mrb[0].mxu0 %v340
  %v425 = vpop.f32.mrb[0].mxu0
  %v426 = vadd.f32 0.0, %v425
  %v427 = vpop.f32.mrb[0].mxu0
  %v428 = vpop.f32.mrb[0].mxu0
  %v429 = vadd.f32 0.0, %v428
  %v430 = vpop.f32.mrb[0].mxu0
  %431 = vmatprep.mubr.bf16.mxu0 0
  %432 = vmatmul.mubr.bf16.gmra.mrb[0].mxu0 %v341
  %v433 = vpop.f32.mrb[0].mxu0
  %v434 = vadd.f32 0.0, %v433
  %v435 = vpop.f32.mrb[0].mxu0
  %v436 = vpop.f32.mrb[0].mxu0
  %v437 = vadd.f32 0.0, %v436
  %v438 = vpop.f32.mrb[0].mxu0
  %439 = vmatprep.mubr.bf16.mxu0 0
  %440 = vmatmul.mubr.bf16.gmra.mrb[0].mxu0 %v342
  %v441 = vpop.f32.mrb[0].mxu0
  %v442 = vadd.f32 0.0, %v441
  %v443 = vpop.f32.mrb[0].mxu0
  %v444 = vpop.f32.mrb[0].mxu0
  %v445 = vadd.f32 0.0, %v444
  %v446 = vpop.f32.mrb[0].mxu0
  %447 = vdwg.mxu0
  %v448 = vadd.f32 %v263, %v386
  %v449 = vadd.f32 %v264, %v389
  %v450 = vadd.f32 %v265, %v394
  %v451 = vadd.f32 %v266, %v397
  %v452 = vadd.f32 %v267, %v402
  %v453 = vadd.f32 %v268, %v405
  %v454 = vadd.f32 %v269, %v410
  %v455 = vadd.f32 %v270, %v413
  %v456 = vadd.f32 %v271, %v418
  %v457 = vadd.f32 %v272, %v421
  %v458 = vadd.f32 %v273, %v426
  %v459 = vadd.f32 %v274, %v429
  %v460 = vadd.f32 %v275, %v434
  %v461 = vadd.f32 %v276, %v437
  %v462 = vadd.f32 %v277, %v442
  %v463 = vadd.f32 %v278, %v445
  %464 = vst [vmem:[#allocation2] sm:$0xff] %v448
  %465 = vst [vmem:[#allocation2 + $0x8] sm:$0xff] %v449
  %466 = vst [vmem:[#allocation2 + $0x10] sm:$0xff] %v450
  %467 = vst [vmem:[#allocation2 + $0x18] sm:$0xff] %v451
  %468 = vst [vmem:[#allocation2 + $0x20] sm:$0xff] %v452
  %469 = vst [vmem:[#allocation2 + $0x28] sm:$0xff] %v453
  %470 = vst [vmem:[#allocation2 + $0x30] sm:$0xff] %v454
  %471 = vst [vmem:[#allocation2 + $0x38] sm:$0xff] %v455
  %472 = vst [vmem:[#allocation2 + $0x40] sm:$0xff] %v456
  %473 = vst [vmem:[#allocation2 + $0x48] sm:$0xff] %v457
  %474 = vst [vmem:[#allocation2 + $0x50] sm:$0xff] %v458
  %475 = vst [vmem:[#allocation2 + $0x58] sm:$0xff] %v459
  %476 = vst [vmem:[#allocation2 + $0x60] sm:$0xff] %v460
  %477 = vst [vmem:[#allocation2 + $0x68] sm:$0xff] %v461
  %478 = vst [vmem:[#allocation2 + $0x70] sm:$0xff] %v462
  %479 = vst [vmem:[#allocation2 + $0x78] sm:$0xff] %v463
  // Predicated region
  $region22: #{_device_forward.5} parent=0 // pred_check
    %p480 = pneg %p18
  $region23: #{_device_forward.5} parent=0 // pred_check_branch
    %482 = sbr.rel (%p480) target = $region25
  $region24: #{_device_forward.5} parent=0 // pred_region
    %v483 = vld [vmem:[#allocation2] sm:$0xff]
    %v484 = vld [vmem:[#allocation2 + $0x8] sm:$0xff]
    %v485 = vld [vmem:[#allocation2 + $0x10] sm:$0xff]
    %v486 = vld [vmem:[#allocation2 + $0x18] sm:$0xff]
    %v487 = vld [vmem:[#allocation2 + $0x20] sm:$0xff]
    %v488 = vld [vmem:[#allocation2 + $0x28] sm:$0xff]
    %v489 = vld [vmem:[#allocation2 + $0x30] sm:$0xff]
    %v490 = vld [vmem:[#allocation2 + $0x38] sm:$0xff]
    %v491 = vld [vmem:[#allocation2 + $0x40] sm:$0xff]
    %v492 = vld [vmem:[#allocation2 + $0x48] sm:$0xff]
    %v493 = vld [vmem:[#allocation2 + $0x50] sm:$0xff]
    %v494 = vld [vmem:[#allocation2 + $0x58] sm:$0xff]
    %v495 = vld [vmem:[#allocation2 + $0x60] sm:$0xff]
    %v496 = vld [vmem:[#allocation2 + $0x68] sm:$0xff]
    %v497 = vld [vmem:[#allocation2 + $0x70] sm:$0xff]
    %v498 = vld [vmem:[#allocation2 + $0x78] sm:$0xff]
    %v499 = vld [vmem:[%s3] sm:$0x1]
    %v501 = vlaneseq
    %v502 = vshrl.u32 %v501, 7
    %v503 = vsub.s32 0, %v502
    %v504 = vrot.slane %v499, %v503
    %v506 = vadd.f32 %v483, %v504
    %v507 = vadd.f32 %v484, %v504
    %v508 = vadd.f32 %v485, %v504
    %v509 = vadd.f32 %v486, %v504
    %v510 = vadd.f32 %v487, %v504
    %v511 = vadd.f32 %v488, %v504
    %v512 = vadd.f32 %v489, %v504
    %v513 = vadd.f32 %v490, %v504
    %v514 = vadd.f32 %v491, %v504
    %v515 = vadd.f32 %v492, %v504
    %v516 = vadd.f32 %v493, %v504
    %v517 = vadd.f32 %v494, %v504
    %v518 = vadd.f32 %v495, %v504
    %v519 = vadd.f32 %v496, %v504
    %v520 = vadd.f32 %v497, %v504
    %v521 = vadd.f32 %v498, %v504
    %v522 = vmax.f32 %v506, 0.0
    %v523 = vmax.f32 %v507, 0.0
    %v524 = vmax.f32 %v508, 0.0
    %v525 = vmax.f32 %v509, 0.0
    %v526 = vmax.f32 %v510, 0.0
    %v527 = vmax.f32 %v511, 0.0
    %v528 = vmax.f32 %v512, 0.0
    %v529 = vmax.f32 %v513, 0.0
    %v530 = vmax.f32 %v514, 0.0
    %v531 = vmax.f32 %v515, 0.0
    %v532 = vmax.f32 %v516, 0.0
    %v533 = vmax.f32 %v517, 0.0
    %v534 = vmax.f32 %v518, 0.0
    %v535 = vmax.f32 %v519, 0.0
    %v536 = vmax.f32 %v520, 0.0
    %v537 = vmax.f32 %v521, 0.0
    %v538 = vpack.c.bf16 %v523, %v522
    %v539 = vpack.c.bf16 %v525, %v524
    %v540 = vpack.c.bf16 %v527, %v526
    %v541 = vpack.c.bf16 %v529, %v528
    %v542 = vpack.c.bf16 %v531, %v530
    %v543 = vpack.c.bf16 %v533, %v532
    %v544 = vpack.c.bf16 %v535, %v534
    %v545 = vpack.c.bf16 %v537, %v536
    %v554 = vunpack.c.l.b16 %v538
    %v555 = vunpack.c.h.b16 %v538
    %v556 = vunpack.c.l.b16 %v539
    %v557 = vunpack.c.h.b16 %v539
    %v558 = vunpack.c.l.b16 %v540
    %v559 = vunpack.c.h.b16 %v540
    %v560 = vunpack.c.l.b16 %v541
    %v561 = vunpack.c.h.b16 %v541
    %v562 = vunpack.c.l.b16 %v542
    %v563 = vunpack.c.h.b16 %v542
    %v564 = vunpack.c.l.b16 %v543
    %v565 = vunpack.c.h.b16 %v543
    %v566 = vunpack.c.l.b16 %v544
    %v567 = vunpack.c.h.b16 %v544
    %v568 = vunpack.c.l.b16 %v545
    %v569 = vunpack.c.h.b16 %v545
    %v570 = vpack.c.b16 %v554, %v554
    %v571 = vpack.c.b16 %v555, %v555
    %v572 = vpack.c.b16 %v556, %v556
    %v573 = vpack.c.b16 %v557, %v557
    %v574 = vpack.c.b16 %v558, %v558
    %v575 = vpack.c.b16 %v559, %v559
    %v576 = vpack.c.b16 %v560, %v560
    %v577 = vpack.c.b16 %v561, %v561
    %v578 = vpack.c.b16 %v562, %v562
    %v579 = vpack.c.b16 %v563, %v563
    %v580 = vpack.c.b16 %v564, %v564
    %v581 = vpack.c.b16 %v565, %v565
    %v582 = vpack.c.b16 %v566, %v566
    %v583 = vpack.c.b16 %v567, %v567
    %v584 = vpack.c.b16 %v568, %v568
    %v585 = vpack.c.b16 %v569, %v569
    %602 = vst [vmem:[%s4] sm:$0xf] %v570
    %603 = vst [vmem:[%s4 + $0x4] sm:$0xf] %v571
    %604 = vst [vmem:[%s4 + $0x8] sm:$0xf] %v572
    %605 = vst [vmem:[%s4 + $0xc] sm:$0xf] %v573
    %606 = vst [vmem:[%s4 + $0x10] sm:$0xf] %v574
    %607 = vst [vmem:[%s4 + $0x14] sm:$0xf] %v575
    %608 = vst [vmem:[%s4 + $0x18] sm:$0xf] %v576
    %609 = vst [vmem:[%s4 + $0x1c] sm:$0xf] %v577
    %610 = vst [vmem:[%s4 + $0x20] sm:$0xf] %v578
    %611 = vst [vmem:[%s4 + $0x24] sm:$0xf] %v579
    %612 = vst [vmem:[%s4 + $0x28] sm:$0xf] %v580
    %613 = vst [vmem:[%s4 + $0x2c] sm:$0xf] %v581
    %614 = vst [vmem:[%s4 + $0x30] sm:$0xf] %v582
    %615 = vst [vmem:[%s4 + $0x34] sm:$0xf] %v583
    %616 = vst [vmem:[%s4 + $0x38] sm:$0xf] %v584
    %617 = vst [vmem:[%s4 + $0x3c] sm:$0xf] %v585
  $region25: #{_device_forward.5} parent=0 // pred_fallthru
    _
  // Predicated region
  $region26: #{_device_forward.5} parent=0 // pred_check
    _
  $region27: #{_device_forward.5} parent=0 // pred_check_branch
    %619 = sbr.rel (0) target = $region29
  $region28: #{_device_forward.5} parent=0 // pred_region
    _
  $region29: #{_device_forward.5} parent=0 // pred_fallthru
    _
  // Predicated region
  $region30: #{_device_forward.5} parent=0 // pred_check
    _
  $region31: #{_device_forward.5} parent=0 // pred_check_branch
    %621 = sbr.rel (0) target = $region33
  $region32: #{_device_forward.5} parent=0 // pred_region
    _
  $region33: #{_device_forward.5} parent=0 // pred_fallthru
    _

// kernel: _device_forward.6
$region0: #{_device_forward.6}
  #allocation0 [shape = 'u32[]', space=smem, size = 0x4, offset = 0x4, fixed_abs, tag = 'smem constant byte address 0x4 - core index']
  #allocation1 [shape = 'u32[144,128]{1,0:T(1,128)}', space=vmem, size = 0x12000, scoped, tag = 'internal scratch']
  %s0 = inlined_call_operand.vmem [shape: bf16[128,128], index: 0, kind: input, shape index: {}]
  %s1 = inlined_call_operand.vmem [shape: bf16[128,128], index: 1, kind: input, shape index: {}]
  %s2 = inlined_call_operand.vmem [shape: f32[128,1], index: 2, kind: output, shape index: {}]
  %s3 = sld [smem:[#allocation0]]
  $region18: #{_device_forward.6} parent=0
    _
  %s5 = ssub.s32 1, %s3
  %s6 = scalar_select 0, %s5, %s3
  // Predicated region
  $region2: #{_device_forward.6} parent=0 // pred_check
    _
  $region3: #{_device_forward.6} parent=0 // pred_check_branch
    %8 = sbr.rel (0) target = $region5
  $region4: #{_device_forward.6} parent=0 // pred_region
    _
  $region5: #{_device_forward.6} parent=0 // pred_fallthru
    _
  // Predicated region
  $region6: #{_device_forward.6} parent=0 // pred_check
    _
  $region7: #{_device_forward.6} parent=0 // pred_check_branch
    %10 = sbr.rel (0) target = $region9
  $region8: #{_device_forward.6} parent=0 // pred_region
    _
  $region9: #{_device_forward.6} parent=0 // pred_fallthru
    _
  %v11 = vld [vmem:[%s0] sm:$0xf]
  %v12 = vld [vmem:[%s0 + $0x4] sm:$0xf]
  %v13 = vld [vmem:[%s0 + $0x8] sm:$0xf]
  %v14 = vld [vmem:[%s0 + $0xc] sm:$0xf]
  %v15 = vld [vmem:[%s0 + $0x10] sm:$0xf]
  %v16 = vld [vmem:[%s0 + $0x14] sm:$0xf]
  %v17 = vld [vmem:[%s0 + $0x18] sm:$0xf]
  %v18 = vld [vmem:[%s0 + $0x1c] sm:$0xf]
  %v19 = vld [vmem:[%s0 + $0x20] sm:$0xf]
  %v20 = vld [vmem:[%s0 + $0x24] sm:$0xf]
  %v21 = vld [vmem:[%s0 + $0x28] sm:$0xf]
  %v22 = vld [vmem:[%s0 + $0x2c] sm:$0xf]
  %v23 = vld [vmem:[%s0 + $0x30] sm:$0xf]
  %v24 = vld [vmem:[%s0 + $0x34] sm:$0xf]
  %v25 = vld [vmem:[%s0 + $0x38] sm:$0xf]
  %v26 = vld [vmem:[%s0 + $0x3c] sm:$0xf]
  %v27 = vunpack.c.l.bf16 %v11
  %v28 = vunpack.c.l.bf16 %v12
  %v29 = vunpack.c.l.bf16 %v13
  %v30 = vunpack.c.l.bf16 %v14
  %v31 = vunpack.c.l.bf16 %v15
  %v32 = vunpack.c.l.bf16 %v16
  %v33 = vunpack.c.l.bf16 %v17
  %v34 = vunpack.c.l.bf16 %v18
  %v35 = vunpack.c.l.bf16 %v19
  %v36 = vunpack.c.l.bf16 %v20
  %v37 = vunpack.c.l.bf16 %v21
  %v38 = vunpack.c.l.bf16 %v22
  %v39 = vunpack.c.l.bf16 %v23
  %v40 = vunpack.c.l.bf16 %v24
  %v41 = vunpack.c.l.bf16 %v25
  %v42 = vunpack.c.l.bf16 %v26
  %v43 = vld [vmem:[%s1] sm:$0xf]
  %v44 = vld [vmem:[%s1 + $0x4] sm:$0xf]
  %v45 = vld [vmem:[%s1 + $0x8] sm:$0xf]
  %v46 = vld [vmem:[%s1 + $0xc] sm:$0xf]
  %v47 = vld [vmem:[%s1 + $0x10] sm:$0xf]
  %v48 = vld [vmem:[%s1 + $0x14] sm:$0xf]
  %v49 = vld [vmem:[%s1 + $0x18] sm:$0xf]
  %v50 = vld [vmem:[%s1 + $0x1c] sm:$0xf]
  %v51 = vld [vmem:[%s1 + $0x20] sm:$0xf]
  %v52 = vld [vmem:[%s1 + $0x24] sm:$0xf]
  %v53 = vld [vmem:[%s1 + $0x28] sm:$0xf]
  %v54 = vld [vmem:[%s1 + $0x2c] sm:$0xf]
  %v55 = vld [vmem:[%s1 + $0x30] sm:$0xf]
  %v56 = vld [vmem:[%s1 + $0x34] sm:$0xf]
  %v57 = vld [vmem:[%s1 + $0x38] sm:$0xf]
  %v58 = vld [vmem:[%s1 + $0x3c] sm:$0xf]
  %v59 = vunpack.c.l.bf16 %v43
  %v60 = vunpack.c.l.bf16 %v44
  %v61 = vunpack.c.l.bf16 %v45
  %v62 = vunpack.c.l.bf16 %v46
  %v63 = vunpack.c.l.bf16 %v47
  %v64 = vunpack.c.l.bf16 %v48
  %v65 = vunpack.c.l.bf16 %v49
  %v66 = vunpack.c.l.bf16 %v50
  %v67 = vunpack.c.l.bf16 %v51
  %v68 = vunpack.c.l.bf16 %v52
  %v69 = vunpack.c.l.bf16 %v53
  %v70 = vunpack.c.l.bf16 %v54
  %v71 = vunpack.c.l.bf16 %v55
  %v72 = vunpack.c.l.bf16 %v56
  %v73 = vunpack.c.l.bf16 %v57
  %v74 = vunpack.c.l.bf16 %v58
  %v75 = vmul.f32 %v27, %v59
  %v76 = vmul.f32 %v28, %v60
  %v77 = vmul.f32 %v29, %v61
  %v78 = vmul.f32 %v30, %v62
  %v79 = vmul.f32 %v31, %v63
  %v80 = vmul.f32 %v32, %v64
  %v81 = vmul.f32 %v33, %v65
  %v82 = vmul.f32 %v34, %v66
  %v83 = vmul.f32 %v35, %v67
  %v84 = vmul.f32 %v36, %v68
  %v85 = vmul.f32 %v37, %v69
  %v86 = vmul.f32 %v38, %v70
  %v87 = vmul.f32 %v39, %v71
  %v88 = vmul.f32 %v40, %v72
  %v89 = vmul.f32 %v41, %v73
  %v90 = vmul.f32 %v42, %v74
  %91 = vadd.xlane.f32.xlu0 %v75
  %v92 = vpop.xlane.xlu0 %91
  %93 = vadd.xlane.f32.xlu0 %v76
  %v94 = vpop.xlane.xlu0 %93
  %95 = vadd.xlane.f32.xlu0 %v77
  %v96 = vpop.xlane.xlu0 %95
  %97 = vadd.xlane.f32.xlu0 %v78
  %v98 = vpop.xlane.xlu0 %97
  %99 = vadd.xlane.f32.xlu0 %v79
  %v100 = vpop.xlane.xlu0 %99
  %101 = vadd.xlane.f32.xlu0 %v80
  %v102 = vpop.xlane.xlu0 %101
  %103 = vadd.xlane.f32.xlu0 %v81
  %v104 = vpop.xlane.xlu0 %103
  %105 = vadd.xlane.f32.xlu0 %v82
  %v106 = vpop.xlane.xlu0 %105
  %107 = vadd.xlane.f32.xlu0 %v83
  %v108 = vpop.xlane.xlu0 %107
  %109 = vadd.xlane.f32.xlu0 %v84
  %v110 = vpop.xlane.xlu0 %109
  %111 = vadd.xlane.f32.xlu0 %v85
  %v112 = vpop.xlane.xlu0 %111
  %113 = vadd.xlane.f32.xlu0 %v86
  %v114 = vpop.xlane.xlu0 %113
  %115 = vadd.xlane.f32.xlu0 %v87
  %v116 = vpop.xlane.xlu0 %115
  %117 = vadd.xlane.f32.xlu0 %v88
  %v118 = vpop.xlane.xlu0 %117
  %119 = vadd.xlane.f32.xlu0 %v89
  %v120 = vpop.xlane.xlu0 %119
  %121 = vadd.xlane.f32.xlu0 %v90
  %v122 = vpop.xlane.xlu0 %121
  %vm123 = vcmask 7168
  %124 = vst.msk [vmem:[%s2] sm:$0xff] %vm123, %v92
  %125 = vst.msk [vmem:[%s2 + $0x8] sm:$0xff] %vm123, %v94
  %126 = vst.msk [vmem:[%s2 + $0x10] sm:$0xff] %vm123, %v96
  %127 = vst.msk [vmem:[%s2 + $0x18] sm:$0xff] %vm123, %v98
  %128 = vst.msk [vmem:[%s2 + $0x20] sm:$0xff] %vm123, %v100
  %129 = vst.msk [vmem:[%s2 + $0x28] sm:$0xff] %vm123, %v102
  %130 = vst.msk [vmem:[%s2 + $0x30] sm:$0xff] %vm123, %v104
  %131 = vst.msk [vmem:[%s2 + $0x38] sm:$0xff] %vm123, %v106
  %132 = vst.msk [vmem:[%s2 + $0x40] sm:$0xff] %vm123, %v108
  %133 = vst.msk [vmem:[%s2 + $0x48] sm:$0xff] %vm123, %v110
  %134 = vst.msk [vmem:[%s2 + $0x50] sm:$0xff] %vm123, %v112
  %135 = vst.msk [vmem:[%s2 + $0x58] sm:$0xff] %vm123, %v114
  %136 = vst.msk [vmem:[%s2 + $0x60] sm:$0xff] %vm123, %v116
  %137 = vst.msk [vmem:[%s2 + $0x68] sm:$0xff] %vm123, %v118
  %138 = vst.msk [vmem:[%s2 + $0x70] sm:$0xff] %vm123, %v120
  %139 = vst.msk [vmem:[%s2 + $0x78] sm:$0xff] %vm123, %v122
  // Predicated region
  $region10: #{_device_forward.6} parent=0 // pred_check
    _
  $region11: #{_device_forward.6} parent=0 // pred_check_branch
    %141 = sbr.rel (0) target = $region13
  $region12: #{_device_forward.6} parent=0 // pred_region
    _
  $region13: #{_device_forward.6} parent=0 // pred_fallthru
    _
  // Predicated region
  $region14: #{_device_forward.6} parent=0 // pred_check
    _
  $region15: #{_device_forward.6} parent=0 // pred_check_branch
    %143 = sbr.rel (0) target = $region17
  $region16: #{_device_forward.6} parent=0 // pred_region
    _
  $region17: #{_device_forward.6} parent=0 // pred_fallthru
    _

// kernel: _device_forward.8
$region0: #{_device_forward.8}
  #allocation0 [shape = 'u32[]', space=smem, size = 0x4, offset = 0x4, fixed_abs, tag = 'smem constant byte address 0x4 - core index']
  #allocation1 [shape = 'u32[144,128]{1,0:T(1,128)}', space=vmem, size = 0x12000, scoped, tag = 'internal scratch']
  #allocation2 [shape = 'f32[128,128]{1,0:T(8,128)}', space=vmem, size = 0x10000, scoped, tag = 'scratch operand']
  %s0 = inlined_call_operand.vmem [shape: bf16[128,128], index: 0, kind: input, shape index: {}]
  %s1 = inlined_call_operand.vmem [shape: bf16[128,128], index: 1, kind: input, shape index: {}]
  %s2 = inlined_call_operand.vmem [shape: bf16[128,128], index: 2, kind: input, shape index: {}]
  %s3 = inlined_call_operand.vmem [shape: f32[1,128], index: 3, kind: input, shape index: {}]
  %s4 = inlined_call_operand.vmem [shape: f32[128,128], index: 4, kind: output, shape index: {}]
  %s5 = sld [smem:[#allocation0]]
  $region34: #{_device_forward.8} parent=0
    _
  %s7 = ssub.s32 1, %s5
  %s8 = scalar_select 0, %s7, %s5
  // Predicated region
  $region2: #{_device_forward.8} parent=0 // pred_check
    _
  $region3: #{_device_forward.8} parent=0 // pred_check_branch
    %10 = sbr.rel (0) target = $region5
  $region4: #{_device_forward.8} parent=0 // pred_region
    _
  $region5: #{_device_forward.8} parent=0 // pred_fallthru
    _
  // Predicated region
  $region6: #{_device_forward.8} parent=0 // pred_check
    _
  $region7: #{_device_forward.8} parent=0 // pred_check_branch
    %12 = sbr.rel (0) target = $region9
  $region8: #{_device_forward.8} parent=0 // pred_region
    _
  $region9: #{_device_forward.8} parent=0 // pred_fallthru
    _
  // Predicated region
  $region10: #{_device_forward.8} parent=0 // pred_check
    _
  $region11: #{_device_forward.8} parent=0 // pred_check_branch
    %14 = sbr.rel (0) target = $region13
  $region12: #{_device_forward.8} parent=0 // pred_region
    _
  $region13: #{_device_forward.8} parent=0 // pred_fallthru
    _
  // Predicated region
  $region14: #{_device_forward.8} parent=0 // pred_check
    _
  $region15: #{_device_forward.8} parent=0 // pred_check_branch
    %16 = sbr.rel (0) target = $region17
  $region16: #{_device_forward.8} parent=0 // pred_region
    _
  $region17: #{_device_forward.8} parent=0 // pred_fallthru
    _
  %p18 = scmp.eq.s32.totalorder 0, 0
  // Predicated region
  $region18: #{_device_forward.8} parent=0 // pred_check
    %p19 = pneg %p18
  $region19: #{_device_forward.8} parent=0 // pred_check_branch
    %21 = sbr.rel (%p19) target = $region21
  $region20: #{_device_forward.8} parent=0 // pred_region
    %22 = vst [vmem:[#allocation2] sm:$0xff] 0.0
    %23 = vst [vmem:[#allocation2 + $0x8] sm:$0xff] 0.0
    %24 = vst [vmem:[#allocation2 + $0x10] sm:$0xff] 0.0
    %25 = vst [vmem:[#allocation2 + $0x18] sm:$0xff] 0.0
    %26 = vst [vmem:[#allocation2 + $0x20] sm:$0xff] 0.0
    %27 = vst [vmem:[#allocation2 + $0x28] sm:$0xff] 0.0
    %28 = vst [vmem:[#allocation2 + $0x30] sm:$0xff] 0.0
    %29 = vst [vmem:[#allocation2 + $0x38] sm:$0xff] 0.0
    %30 = vst [vmem:[#allocation2 + $0x40] sm:$0xff] 0.0
    %31 = vst [vmem:[#allocation2 + $0x48] sm:$0xff] 0.0
    %32 = vst [vmem:[#allocation2 + $0x50] sm:$0xff] 0.0
    %33 = vst [vmem:[#allocation2 + $0x58] sm:$0xff] 0.0
    %34 = vst [vmem:[#allocation2 + $0x60] sm:$0xff] 0.0
    %35 = vst [vmem:[#allocation2 + $0x68] sm:$0xff] 0.0
    %36 = vst [vmem:[#allocation2 + $0x70] sm:$0xff] 0.0
    %37 = vst [vmem:[#allocation2 + $0x78] sm:$0xff] 0.0
  $region21: #{_device_forward.8} parent=0 // pred_fallthru
    _
  %v38 = vld [vmem:[%s1] sm:$0xf]
  %v39 = vld [vmem:[%s1 + $0x4] sm:$0xf]
  %v40 = vld [vmem:[%s1 + $0x8] sm:$0xf]
  %v41 = vld [vmem:[%s1 + $0xc] sm:$0xf]
  %v42 = vld [vmem:[%s1 + $0x10] sm:$0xf]
  %v43 = vld [vmem:[%s1 + $0x14] sm:$0xf]
  %v44 = vld [vmem:[%s1 + $0x18] sm:$0xf]
  %v45 = vld [vmem:[%s1 + $0x1c] sm:$0xf]
  %v46 = vld [vmem:[%s1 + $0x20] sm:$0xf]
  %v47 = vld [vmem:[%s1 + $0x24] sm:$0xf]
  %v48 = vld [vmem:[%s1 + $0x28] sm:$0xf]
  %v49 = vld [vmem:[%s1 + $0x2c] sm:$0xf]
  %v50 = vld [vmem:[%s1 + $0x30] sm:$0xf]
  %v51 = vld [vmem:[%s1 + $0x34] sm:$0xf]
  %v52 = vld [vmem:[%s1 + $0x38] sm:$0xf]
  %v53 = vld [vmem:[%s1 + $0x3c] sm:$0xf]
  %v54 = vld [vmem:[%s2] sm:$0xf]
  %v55 = vld [vmem:[%s2 + $0x4] sm:$0xf]
  %v56 = vld [vmem:[%s2 + $0x8] sm:$0xf]
  %v57 = vld [vmem:[%s2 + $0xc] sm:$0xf]
  %v58 = vld [vmem:[%s2 + $0x10] sm:$0xf]
  %v59 = vld [vmem:[%s2 + $0x14] sm:$0xf]
  %v60 = vld [vmem:[%s2 + $0x18] sm:$0xf]
  %v61 = vld [vmem:[%s2 + $0x1c] sm:$0xf]
  %v62 = vld [vmem:[%s2 + $0x20] sm:$0xf]
  %v63 = vld [vmem:[%s2 + $0x24] sm:$0xf]
  %v64 = vld [vmem:[%s2 + $0x28] sm:$0xf]
  %v65 = vld [vmem:[%s2 + $0x2c] sm:$0xf]
  %v66 = vld [vmem:[%s2 + $0x30] sm:$0xf]
  %v67 = vld [vmem:[%s2 + $0x34] sm:$0xf]
  %v68 = vld [vmem:[%s2 + $0x38] sm:$0xf]
  %v69 = vld [vmem:[%s2 + $0x3c] sm:$0xf]
  %v86 = vunpack.c.l.b16 %v38
  %v87 = vunpack.c.l.b16 %v39
  %v88 = vunpack.c.l.b16 %v40
  %v89 = vunpack.c.l.b16 %v41
  %v90 = vunpack.c.l.b16 %v42
  %v91 = vunpack.c.l.b16 %v43
  %v92 = vunpack.c.l.b16 %v44
  %v93 = vunpack.c.l.b16 %v45
  %v94 = vunpack.c.l.b16 %v46
  %v95 = vunpack.c.l.b16 %v47
  %v96 = vunpack.c.l.b16 %v48
  %v97 = vunpack.c.l.b16 %v49
  %v98 = vunpack.c.l.b16 %v50
  %v99 = vunpack.c.l.b16 %v51
  %v100 = vunpack.c.l.b16 %v52
  %v101 = vunpack.c.l.b16 %v53
  %v102 = vpack.c.b16 %v87, %v86
  %v103 = vpack.c.b16 %v89, %v88
  %v104 = vpack.c.b16 %v91, %v90
  %v105 = vpack.c.b16 %v93, %v92
  %v106 = vpack.c.b16 %v95, %v94
  %v107 = vpack.c.b16 %v97, %v96
  %v108 = vpack.c.b16 %v99, %v98
  %v109 = vpack.c.b16 %v101, %v100
  %v134 = vunpack.c.l.b16 %v54
  %v135 = vunpack.c.l.b16 %v55
  %v136 = vunpack.c.l.b16 %v56
  %v137 = vunpack.c.l.b16 %v57
  %v138 = vunpack.c.l.b16 %v58
  %v139 = vunpack.c.l.b16 %v59
  %v140 = vunpack.c.l.b16 %v60
  %v141 = vunpack.c.l.b16 %v61
  %v142 = vunpack.c.l.b16 %v62
  %v143 = vunpack.c.l.b16 %v63
  %v144 = vunpack.c.l.b16 %v64
  %v145 = vunpack.c.l.b16 %v65
  %v146 = vunpack.c.l.b16 %v66
  %v147 = vunpack.c.l.b16 %v67
  %v148 = vunpack.c.l.b16 %v68
  %v149 = vunpack.c.l.b16 %v69
  %v150 = vpack.c.b16 %v135, %v134
  %v151 = vpack.c.b16 %v137, %v136
  %v152 = vpack.c.b16 %v139, %v138
  %v153 = vpack.c.b16 %v141, %v140
  %v154 = vpack.c.b16 %v143, %v142
  %v155 = vpack.c.b16 %v145, %v144
  %v156 = vpack.c.b16 %v147, %v146
  %v157 = vpack.c.b16 %v149, %v148
  %166 = vmatprep.subr.bf16.mxu0 0
  %167 = vmatpush1.bf16.msra.mxu0 %v150
  %168 = vmatprep.subr.bf16.mxu0 0
  %169 = vmatpush1.bf16.msra.mxu0 %v151
  %170 = vmatprep.subr.bf16.mxu0 0
  %171 = vmatpush1.bf16.msra.mxu0 %v152
  %172 = vmatprep.subr.bf16.mxu0 0
  %173 = vmatpush1.bf16.msra.mxu0 %v153
  %174 = vmatprep.subr.bf16.mxu0 0
  %175 = vmatpush1.bf16.msra.mxu0 %v154
  %176 = vmatprep.subr.bf16.mxu0 0
  %177 = vmatpush1.bf16.msra.mxu0 %v155
  %178 = vmatprep.subr.bf16.mxu0 0
  %179 = vmatpush1.bf16.msra.mxu0 %v156
  %180 = vmatprep.subr.bf16.mxu0 0
  %181 = vmatpush1.bf16.msra.mxu0 %v157
  %182 = vmatprep.subr.bf16.mxu0 0
  %183 = vmatpush1.bf16.msra.mxu0 0
  %184 = vmatprep.subr.bf16.mxu0 0
  %185 = vmatpush1.bf16.msra.mxu0 0
  %186 = vmatprep.subr.bf16.mxu0 0
  %187 = vmatpush1.bf16.msra.mxu0 0
  %188 = vmatprep.subr.bf16.mxu0 0
  %189 = vmatpush1.bf16.msra.mxu0 0
  %190 = vmatprep.subr.bf16.mxu0 0
  %191 = vmatpush1.bf16.msra.mxu0 0
  %192 = vmatprep.subr.bf16.mxu0 0
  %193 = vmatpush1.bf16.msra.mxu0 0
  %194 = vmatprep.subr.bf16.mxu0 0
  %195 = vmatpush1.bf16.msra.mxu0 0
  %196 = vmatprep.subr.bf16.mxu0 0
  %197 = vmatpush1.bf16.msra.mxu0 0
  %198 = vmatprep.mubr.bf16.mxu0 0
  %199 = vmatmul.mubr.bf16.gmra.mrb[0].mxu0 %v102
  %v200 = vpop.f32.mrb[0].mxu0
  %v201 = vadd.f32 0.0, %v200
  %v202 = vpop.f32.mrb[0].mxu0
  %v203 = vpop.f32.mrb[0].mxu0
  %v204 = vadd.f32 0.0, %v203
  %v205 = vpop.f32.mrb[0].mxu0
  %206 = vmatprep.mubr.bf16.mxu0 0
  %207 = vmatmul.mubr.bf16.gmra.mrb[0].mxu0 %v103
  %v208 = vpop.f32.mrb[0].mxu0
  %v209 = vadd.f32 0.0, %v208
  %v210 = vpop.f32.mrb[0].mxu0
  %v211 = vpop.f32.mrb[0].mxu0
  %v212 = vadd.f32 0.0, %v211
  %v213 = vpop.f32.mrb[0].mxu0
  %214 = vmatprep.mubr.bf16.mxu0 0
  %215 = vmatmul.mubr.bf16.gmra.mrb[0].mxu0 %v104
  %v216 = vpop.f32.mrb[0].mxu0
  %v217 = vadd.f32 0.0, %v216
  %v218 = vpop.f32.mrb[0].mxu0
  %v219 = vpop.f32.mrb[0].mxu0
  %v220 = vadd.f32 0.0, %v219
  %v221 = vpop.f32.mrb[0].mxu0
  %222 = vmatprep.mubr.bf16.mxu0 0
  %223 = vmatmul.mubr.bf16.gmra.mrb[0].mxu0 %v105
  %v224 = vpop.f32.mrb[0].mxu0
  %v225 = vadd.f32 0.0, %v224
  %v226 = vpop.f32.mrb[0].mxu0
  %v227 = vpop.f32.mrb[0].mxu0
  %v228 = vadd.f32 0.0, %v227
  %v229 = vpop.f32.mrb[0].mxu0
  %230 = vmatprep.mubr.bf16.mxu0 0
  %231 = vmatmul.mubr.bf16.gmra.mrb[0].mxu0 %v106
  %v232 = vpop.f32.mrb[0].mxu0
  %v233 = vadd.f32 0.0, %v232
  %v234 = vpop.f32.mrb[0].mxu0
  %v235 = vpop.f32.mrb[0].mxu0
  %v236 = vadd.f32 0.0, %v235
  %v237 = vpop.f32.mrb[0].mxu0
  %238 = vmatprep.mubr.bf16.mxu0 0
  %239 = vmatmul.mubr.bf16.gmra.mrb[0].mxu0 %v107
  %v240 = vpop.f32.mrb[0].mxu0
  %v241 = vadd.f32 0.0, %v240
  %v242 = vpop.f32.mrb[0].mxu0
  %v243 = vpop.f32.mrb[0].mxu0
  %v244 = vadd.f32 0.0, %v243
  %v245 = vpop.f32.mrb[0].mxu0
  %246 = vmatprep.mubr.bf16.mxu0 0
  %247 = vmatmul.mubr.bf16.gmra.mrb[0].mxu0 %v108
  %v248 = vpop.f32.mrb[0].mxu0
  %v249 = vadd.f32 0.0, %v248
  %v250 = vpop.f32.mrb[0].mxu0
  %v251 = vpop.f32.mrb[0].mxu0
  %v252 = vadd.f32 0.0, %v251
  %v253 = vpop.f32.mrb[0].mxu0
  %254 = vmatprep.mubr.bf16.mxu0 0
  %255 = vmatmul.mubr.bf16.gmra.mrb[0].mxu0 %v109
  %v256 = vpop.f32.mrb[0].mxu0
  %v257 = vadd.f32 0.0, %v256
  %v258 = vpop.f32.mrb[0].mxu0
  %v259 = vpop.f32.mrb[0].mxu0
  %v260 = vadd.f32 0.0, %v259
  %v261 = vpop.f32.mrb[0].mxu0
  %262 = vdwg.mxu0
  %v263 = vld [vmem:[#allocation2] sm:$0xff]
  %v264 = vld [vmem:[#allocation2 + $0x8] sm:$0xff]
  %v265 = vld [vmem:[#allocation2 + $0x10] sm:$0xff]
  %v266 = vld [vmem:[#allocation2 + $0x18] sm:$0xff]
  %v267 = vld [vmem:[#allocation2 + $0x20] sm:$0xff]
  %v268 = vld [vmem:[#allocation2 + $0x28] sm:$0xff]
  %v269 = vld [vmem:[#allocation2 + $0x30] sm:$0xff]
  %v270 = vld [vmem:[#allocation2 + $0x38] sm:$0xff]
  %v271 = vld [vmem:[#allocation2 + $0x40] sm:$0xff]
  %v272 = vld [vmem:[#allocation2 + $0x48] sm:$0xff]
  %v273 = vld [vmem:[#allocation2 + $0x50] sm:$0xff]
  %v274 = vld [vmem:[#allocation2 + $0x58] sm:$0xff]
  %v275 = vld [vmem:[#allocation2 + $0x60] sm:$0xff]
  %v276 = vld [vmem:[#allocation2 + $0x68] sm:$0xff]
  %v277 = vld [vmem:[#allocation2 + $0x70] sm:$0xff]
  %v278 = vld [vmem:[#allocation2 + $0x78] sm:$0xff]
  %v279 = vld [vmem:[%s0] sm:$0xf]
  %v280 = vld [vmem:[%s0 + $0x4] sm:$0xf]
  %v281 = vld [vmem:[%s0 + $0x8] sm:$0xf]
  %v282 = vld [vmem:[%s0 + $0xc] sm:$0xf]
  %v283 = vld [vmem:[%s0 + $0x10] sm:$0xf]
  %v284 = vld [vmem:[%s0 + $0x14] sm:$0xf]
  %v285 = vld [vmem:[%s0 + $0x18] sm:$0xf]
  %v286 = vld [vmem:[%s0 + $0x1c] sm:$0xf]
  %v287 = vld [vmem:[%s0 + $0x20] sm:$0xf]
  %v288 = vld [vmem:[%s0 + $0x24] sm:$0xf]
  %v289 = vld [vmem:[%s0 + $0x28] sm:$0xf]
  %v290 = vld [vmem:[%s0 + $0x2c] sm:$0xf]
  %v291 = vld [vmem:[%s0 + $0x30] sm:$0xf]
  %v292 = vld [vmem:[%s0 + $0x34] sm:$0xf]
  %v293 = vld [vmem:[%s0 + $0x38] sm:$0xf]
  %v294 = vld [vmem:[%s0 + $0x3c] sm:$0xf]
  %v295 = vpack.c.bf16 %v204, %v201
  %v296 = vpack.c.bf16 %v212, %v209
  %v297 = vpack.c.bf16 %v220, %v217
  %v298 = vpack.c.bf16 %v228, %v225
  %v299 = vpack.c.bf16 %v236, %v233
  %v300 = vpack.c.bf16 %v244, %v241
  %v301 = vpack.c.bf16 %v252, %v249
  %v302 = vpack.c.bf16 %v260, %v257
  %v319 = vunpack.c.l.b16 %v279
  %v320 = vunpack.c.l.b16 %v280
  %v321 = vunpack.c.l.b16 %v281
  %v322 = vunpack.c.l.b16 %v282
  %v323 = vunpack.c.l.b16 %v283
  %v324 = vunpack.c.l.b16 %v284
  %v325 = vunpack.c.l.b16 %v285
  %v326 = vunpack.c.l.b16 %v286
  %v327 = vunpack.c.l.b16 %v287
  %v328 = vunpack.c.l.b16 %v288
  %v329 = vunpack.c.l.b16 %v289
  %v330 = vunpack.c.l.b16 %v290
  %v331 = vunpack.c.l.b16 %v291
  %v332 = vunpack.c.l.b16 %v292
  %v333 = vunpack.c.l.b16 %v293
  %v334 = vunpack.c.l.b16 %v294
  %v335 = vpack.c.b16 %v320, %v319
  %v336 = vpack.c.b16 %v322, %v321
  %v337 = vpack.c.b16 %v324, %v323
  %v338 = vpack.c.b16 %v326, %v325
  %v339 = vpack.c.b16 %v328, %v327
  %v340 = vpack.c.b16 %v330, %v329
  %v341 = vpack.c.b16 %v332, %v331
  %v342 = vpack.c.b16 %v334, %v333
  %351 = vmatprep.subr.bf16.mxu0 0
  %352 = vmatpush1.bf16.msra.mxu0 %v295
  %353 = vmatprep.subr.bf16.mxu0 0
  %354 = vmatpush1.bf16.msra.mxu0 %v296
  %355 = vmatprep.subr.bf16.mxu0 0
  %356 = vmatpush1.bf16.msra.mxu0 %v297
  %357 = vmatprep.subr.bf16.mxu0 0
  %358 = vmatpush1.bf16.msra.mxu0 %v298
  %359 = vmatprep.subr.bf16.mxu0 0
  %360 = vmatpush1.bf16.msra.mxu0 %v299
  %361 = vmatprep.subr.bf16.mxu0 0
  %362 = vmatpush1.bf16.msra.mxu0 %v300
  %363 = vmatprep.subr.bf16.mxu0 0
  %364 = vmatpush1.bf16.msra.mxu0 %v301
  %365 = vmatprep.subr.bf16.mxu0 0
  %366 = vmatpush1.bf16.msra.mxu0 %v302
  %367 = vmatprep.subr.bf16.mxu0 0
  %368 = vmatpush1.bf16.msra.mxu0 0
  %369 = vmatprep.subr.bf16.mxu0 0
  %370 = vmatpush1.bf16.msra.mxu0 0
  %371 = vmatprep.subr.bf16.mxu0 0
  %372 = vmatpush1.bf16.msra.mxu0 0
  %373 = vmatprep.subr.bf16.mxu0 0
  %374 = vmatpush1.bf16.msra.mxu0 0
  %375 = vmatprep.subr.bf16.mxu0 0
  %376 = vmatpush1.bf16.msra.mxu0 0
  %377 = vmatprep.subr.bf16.mxu0 0
  %378 = vmatpush1.bf16.msra.mxu0 0
  %379 = vmatprep.subr.bf16.mxu0 0
  %380 = vmatpush1.bf16.msra.mxu0 0
  %381 = vmatprep.subr.bf16.mxu0 0
  %382 = vmatpush1.bf16.msra.mxu0 0
  %383 = vmatprep.mubr.bf16.mxu0 0
  %384 = vmatmul.mubr.bf16.gmra.mrb[0].mxu0 %v335
  %v385 = vpop.f32.mrb[0].mxu0
  %v386 = vadd.f32 0.0, %v385
  %v387 = vpop.f32.mrb[0].mxu0
  %v388 = vpop.f32.mrb[0].mxu0
  %v389 = vadd.f32 0.0, %v388
  %v390 = vpop.f32.mrb[0].mxu0
  %391 = vmatprep.mubr.bf16.mxu0 0
  %392 = vmatmul.mubr.bf16.gmra.mrb[0].mxu0 %v336
  %v393 = vpop.f32.mrb[0].mxu0
  %v394 = vadd.f32 0.0, %v393
  %v395 = vpop.f32.mrb[0].mxu0
  %v396 = vpop.f32.mrb[0].mxu0
  %v397 = vadd.f32 0.0, %v396
  %v398 = vpop.f32.mrb[0].mxu0
  %399 = vmatprep.mubr.bf16.mxu0 0
  %400 = vmatmul.mubr.bf16.gmra.mrb[0].mxu0 %v337
  %v401 = vpop.f32.mrb[0].mxu0
  %v402 = vadd.f32 0.0, %v401
  %v403 = vpop.f32.mrb[0].mxu0
  %v404 = vpop.f32.mrb[0].mxu0
  %v405 = vadd.f32 0.0, %v404
  %v406 = vpop.f32.mrb[0].mxu0
  %407 = vmatprep.mubr.bf16.mxu0 0
  %408 = vmatmul.mubr.bf16.gmra.mrb[0].mxu0 %v338
  %v409 = vpop.f32.mrb[0].mxu0
  %v410 = vadd.f32 0.0, %v409
  %v411 = vpop.f32.mrb[0].mxu0
  %v412 = vpop.f32.mrb[0].mxu0
  %v413 = vadd.f32 0.0, %v412
  %v414 = vpop.f32.mrb[0].mxu0
  %415 = vmatprep.mubr.bf16.mxu0 0
  %416 = vmatmul.mubr.bf16.gmra.mrb[0].mxu0 %v339
  %v417 = vpop.f32.mrb[0].mxu0
  %v418 = vadd.f32 0.0, %v417
  %v419 = vpop.f32.mrb[0].mxu0
  %v420 = vpop.f32.mrb[0].mxu0
  %v421 = vadd.f32 0.0, %v420
  %v422 = vpop.f32.mrb[0].mxu0
  %423 = vmatprep.mubr.bf16.mxu0 0
  %424 = vmatmul.mubr.bf16.gmra.mrb[0].mxu0 %v340
  %v425 = vpop.f32.mrb[0].mxu0
  %v426 = vadd.f32 0.0, %v425
  %v427 = vpop.f32.mrb[0].mxu0
  %v428 = vpop.f32.mrb[0].mxu0
  %v429 = vadd.f32 0.0, %v428
  %v430 = vpop.f32.mrb[0].mxu0
  %431 = vmatprep.mubr.bf16.mxu0 0
  %432 = vmatmul.mubr.bf16.gmra.mrb[0].mxu0 %v341
  %v433 = vpop.f32.mrb[0].mxu0
  %v434 = vadd.f32 0.0, %v433
  %v435 = vpop.f32.mrb[0].mxu0
  %v436 = vpop.f32.mrb[0].mxu0
  %v437 = vadd.f32 0.0, %v436
  %v438 = vpop.f32.mrb[0].mxu0
  %439 = vmatprep.mubr.bf16.mxu0 0
  %440 = vmatmul.mubr.bf16.gmra.mrb[0].mxu0 %v342
  %v441 = vpop.f32.mrb[0].mxu0
  %v442 = vadd.f32 0.0, %v441
  %v443 = vpop.f32.mrb[0].mxu0
  %v444 = vpop.f32.mrb[0].mxu0
  %v445 = vadd.f32 0.0, %v444
  %v446 = vpop.f32.mrb[0].mxu0
  %447 = vdwg.mxu0
  %v448 = vadd.f32 %v263, %v386
  %v449 = vadd.f32 %v264, %v389
  %v450 = vadd.f32 %v265, %v394
  %v451 = vadd.f32 %v266, %v397
  %v452 = vadd.f32 %v267, %v402
  %v453 = vadd.f32 %v268, %v405
  %v454 = vadd.f32 %v269, %v410
  %v455 = vadd.f32 %v270, %v413
  %v456 = vadd.f32 %v271, %v418
  %v457 = vadd.f32 %v272, %v421
  %v458 = vadd.f32 %v273, %v426
  %v459 = vadd.f32 %v274, %v429
  %v460 = vadd.f32 %v275, %v434
  %v461 = vadd.f32 %v276, %v437
  %v462 = vadd.f32 %v277, %v442
  %v463 = vadd.f32 %v278, %v445
  %464 = vst [vmem:[#allocation2] sm:$0xff] %v448
  %465 = vst [vmem:[#allocation2 + $0x8] sm:$0xff] %v449
  %466 = vst [vmem:[#allocation2 + $0x10] sm:$0xff] %v450
  %467 = vst [vmem:[#allocation2 + $0x18] sm:$0xff] %v451
  %468 = vst [vmem:[#allocation2 + $0x20] sm:$0xff] %v452
  %469 = vst [vmem:[#allocation2 + $0x28] sm:$0xff] %v453
  %470 = vst [vmem:[#allocation2 + $0x30] sm:$0xff] %v454
  %471 = vst [vmem:[#allocation2 + $0x38] sm:$0xff] %v455
  %472 = vst [vmem:[#allocation2 + $0x40] sm:$0xff] %v456
  %473 = vst [vmem:[#allocation2 + $0x48] sm:$0xff] %v457
  %474 = vst [vmem:[#allocation2 + $0x50] sm:$0xff] %v458
  %475 = vst [vmem:[#allocation2 + $0x58] sm:$0xff] %v459
  %476 = vst [vmem:[#allocation2 + $0x60] sm:$0xff] %v460
  %477 = vst [vmem:[#allocation2 + $0x68] sm:$0xff] %v461
  %478 = vst [vmem:[#allocation2 + $0x70] sm:$0xff] %v462
  %479 = vst [vmem:[#allocation2 + $0x78] sm:$0xff] %v463
  // Predicated region
  $region22: #{_device_forward.8} parent=0 // pred_check
    %p480 = pneg %p18
  $region23: #{_device_forward.8} parent=0 // pred_check_branch
    %482 = sbr.rel (%p480) target = $region25
  $region24: #{_device_forward.8} parent=0 // pred_region
    %v483 = vld [vmem:[#allocation2] sm:$0xff]
    %v484 = vld [vmem:[#allocation2 + $0x8] sm:$0xff]
    %v485 = vld [vmem:[#allocation2 + $0x10] sm:$0xff]
    %v486 = vld [vmem:[#allocation2 + $0x18] sm:$0xff]
    %v487 = vld [vmem:[#allocation2 + $0x20] sm:$0xff]
    %v488 = vld [vmem:[#allocation2 + $0x28] sm:$0xff]
    %v489 = vld [vmem:[#allocation2 + $0x30] sm:$0xff]
    %v490 = vld [vmem:[#allocation2 + $0x38] sm:$0xff]
    %v491 = vld [vmem:[#allocation2 + $0x40] sm:$0xff]
    %v492 = vld [vmem:[#allocation2 + $0x48] sm:$0xff]
    %v493 = vld [vmem:[#allocation2 + $0x50] sm:$0xff]
    %v494 = vld [vmem:[#allocation2 + $0x58] sm:$0xff]
    %v495 = vld [vmem:[#allocation2 + $0x60] sm:$0xff]
    %v496 = vld [vmem:[#allocation2 + $0x68] sm:$0xff]
    %v497 = vld [vmem:[#allocation2 + $0x70] sm:$0xff]
    %v498 = vld [vmem:[#allocation2 + $0x78] sm:$0xff]
    %v499 = vld [vmem:[%s3] sm:$0x1]
    %v501 = vlaneseq
    %v502 = vshrl.u32 %v501, 7
    %v503 = vsub.s32 0, %v502
    %v504 = vrot.slane %v499, %v503
    %v506 = vadd.f32 %v483, %v504
    %v507 = vadd.f32 %v484, %v504
    %v508 = vadd.f32 %v485, %v504
    %v509 = vadd.f32 %v486, %v504
    %v510 = vadd.f32 %v487, %v504
    %v511 = vadd.f32 %v488, %v504
    %v512 = vadd.f32 %v489, %v504
    %v513 = vadd.f32 %v490, %v504
    %v514 = vadd.f32 %v491, %v504
    %v515 = vadd.f32 %v492, %v504
    %v516 = vadd.f32 %v493, %v504
    %v517 = vadd.f32 %v494, %v504
    %v518 = vadd.f32 %v495, %v504
    %v519 = vadd.f32 %v496, %v504
    %v520 = vadd.f32 %v497, %v504
    %v521 = vadd.f32 %v498, %v504
    %v522 = vmax.f32 %v506, 0.0
    %v523 = vmax.f32 %v507, 0.0
    %v524 = vmax.f32 %v508, 0.0
    %v525 = vmax.f32 %v509, 0.0
    %v526 = vmax.f32 %v510, 0.0
    %v527 = vmax.f32 %v511, 0.0
    %v528 = vmax.f32 %v512, 0.0
    %v529 = vmax.f32 %v513, 0.0
    %v530 = vmax.f32 %v514, 0.0
    %v531 = vmax.f32 %v515, 0.0
    %v532 = vmax.f32 %v516, 0.0
    %v533 = vmax.f32 %v517, 0.0
    %v534 = vmax.f32 %v518, 0.0
    %v535 = vmax.f32 %v519, 0.0
    %v536 = vmax.f32 %v520, 0.0
    %v537 = vmax.f32 %v521, 0.0
    %538 = vst [vmem:[%s4] sm:$0xff] %v522
    %539 = vst [vmem:[%s4 + $0x8] sm:$0xff] %v523
    %540 = vst [vmem:[%s4 + $0x10] sm:$0xff] %v524
    %541 = vst [vmem:[%s4 + $0x18] sm:$0xff] %v525
    %542 = vst [vmem:[%s4 + $0x20] sm:$0xff] %v526
    %543 = vst [vmem:[%s4 + $0x28] sm:$0xff] %v527
    %544 = vst [vmem:[%s4 + $0x30] sm:$0xff] %v528
    %545 = vst [vmem:[%s4 + $0x38] sm:$0xff] %v529
    %546 = vst [vmem:[%s4 + $0x40] sm:$0xff] %v530
    %547 = vst [vmem:[%s4 + $0x48] sm:$0xff] %v531
    %548 = vst [vmem:[%s4 + $0x50] sm:$0xff] %v532
    %549 = vst [vmem:[%s4 + $0x58] sm:$0xff] %v533
    %550 = vst [vmem:[%s4 + $0x60] sm:$0xff] %v534
    %551 = vst [vmem:[%s4 + $0x68] sm:$0xff] %v535
    %552 = vst [vmem:[%s4 + $0x70] sm:$0xff] %v536
    %553 = vst [vmem:[%s4 + $0x78] sm:$0xff] %v537
  $region25: #{_device_forward.8} parent=0 // pred_fallthru
    _
  // Predicated region
  $region26: #{_device_forward.8} parent=0 // pred_check
    _
  $region27: #{_device_forward.8} parent=0 // pred_check_branch
    %555 = sbr.rel (0) target = $region29
  $region28: #{_device_forward.8} parent=0 // pred_region
    _
  $region29: #{_device_forward.8} parent=0 // pred_fallthru
    _
  // Predicated region
  $region30: #{_device_forward.8} parent=0 // pred_check
    _
  $region31: #{_device_forward.8} parent=0 // pred_check_branch
    %557 = sbr.rel (0) target = $region33
  $region32: #{_device_forward.8} parent=0 // pred_region
    _
  $region33: #{_device_forward.8} parent=0 // pred_fallthru
    _

// kernel: _device_forward.9
$region0: #{_device_forward.9}
  #allocation0 [shape = 'u32[]', space=smem, size = 0x4, offset = 0x4, fixed_abs, tag = 'smem constant byte address 0x4 - core index']
  #allocation1 [shape = 'u32[144,128]{1,0:T(1,128)}', space=vmem, size = 0x12000, scoped, tag = 'internal scratch']
  #allocation2 [shape = 'f32[8,128]{1,0:T(8,128)}', space=vmem, size = 0x1000, scoped, tag = 'scratch operand']
  %s0 = inlined_call_operand.vmem [shape: f32[8,128], index: 0, kind: input, shape index: {}]
  %s1 = inlined_call_operand.vmem [shape: f32[128,128], index: 1, kind: input, shape index: {}]
  %s2 = inlined_call_operand.vmem [shape: f32[128,128], index: 2, kind: input, shape index: {}]
  %s3 = inlined_call_operand.vmem [shape: f32[1,128], index: 3, kind: input, shape index: {}]
  %s4 = inlined_call_operand.vmem [shape: f32[128,128], index: 4, kind: input, shape index: {}]
  %s5 = inlined_call_operand.vmem [shape: f32[1,128], index: 5, kind: input, shape index: {}]
  %s6 = inlined_call_operand.vmem [shape: f32[8,128], index: 6, kind: output, shape index: {}]
  %s7 = sld [smem:[#allocation0]]
  $region42: #{_device_forward.9} parent=0
    _
  %s9 = ssub.s32 1, %s7
  %s10 = scalar_select 0, %s9, %s7
  // Predicated region
  $region2: #{_device_forward.9} parent=0 // pred_check
    _
  $region3: #{_device_forward.9} parent=0 // pred_check_branch
    %12 = sbr.rel (0) target = $region5
  $region4: #{_device_forward.9} parent=0 // pred_region
    _
  $region5: #{_device_forward.9} parent=0 // pred_fallthru
    _
  // Predicated region
  $region6: #{_device_forward.9} parent=0 // pred_check
    _
  $region7: #{_device_forward.9} parent=0 // pred_check_branch
    %14 = sbr.rel (0) target = $region9
  $region8: #{_device_forward.9} parent=0 // pred_region
    _
  $region9: #{_device_forward.9} parent=0 // pred_fallthru
    _
  // Predicated region
  $region10: #{_device_forward.9} parent=0 // pred_check
    _
  $region11: #{_device_forward.9} parent=0 // pred_check_branch
    %16 = sbr.rel (0) target = $region13
  $region12: #{_device_forward.9} parent=0 // pred_region
    _
  $region13: #{_device_forward.9} parent=0 // pred_fallthru
    _
  // Predicated region
  $region14: #{_device_forward.9} parent=0 // pred_check
    _
  $region15: #{_device_forward.9} parent=0 // pred_check_branch
    %18 = sbr.rel (0) target = $region17
  $region16: #{_device_forward.9} parent=0 // pred_region
    _
  $region17: #{_device_forward.9} parent=0 // pred_fallthru
    _
  // Predicated region
  $region18: #{_device_forward.9} parent=0 // pred_check
    _
  $region19: #{_device_forward.9} parent=0 // pred_check_branch
    %20 = sbr.rel (0) target = $region21
  $region20: #{_device_forward.9} parent=0 // pred_region
    _
  $region21: #{_device_forward.9} parent=0 // pred_fallthru
    _
  // Predicated region
  $region22: #{_device_forward.9} parent=0 // pred_check
    _
  $region23: #{_device_forward.9} parent=0 // pred_check_branch
    %22 = sbr.rel (0) target = $region25
  $region24: #{_device_forward.9} parent=0 // pred_region
    _
  $region25: #{_device_forward.9} parent=0 // pred_fallthru
    _
  %p23 = scmp.eq.s32.totalorder 0, 0
  // Predicated region
  $region26: #{_device_forward.9} parent=0 // pred_check
    %p24 = pneg %p23
  $region27: #{_device_forward.9} parent=0 // pred_check_branch
    %26 = sbr.rel (%p24) target = $region29
  $region28: #{_device_forward.9} parent=0 // pred_region
    %27 = vst [vmem:[#allocation2] sm:$0xff] 0.0
  $region29: #{_device_forward.9} parent=0 // pred_fallthru
    _
  %v28 = vld [vmem:[#allocation2] sm:$0xff]
  %v29 = vld [vmem:[%s0] sm:$0xff]
  %v30 = vld [vmem:[%s1] sm:$0xff]
  %v31 = vld [vmem:[%s1 + $0x8] sm:$0xff]
  %v32 = vld [vmem:[%s1 + $0x10] sm:$0xff]
  %v33 = vld [vmem:[%s1 + $0x18] sm:$0xff]
  %v34 = vld [vmem:[%s1 + $0x20] sm:$0xff]
  %v35 = vld [vmem:[%s1 + $0x28] sm:$0xff]
  %v36 = vld [vmem:[%s1 + $0x30] sm:$0xff]
  %v37 = vld [vmem:[%s1 + $0x38] sm:$0xff]
  %v38 = vld [vmem:[%s1 + $0x40] sm:$0xff]
  %v39 = vld [vmem:[%s1 + $0x48] sm:$0xff]
  %v40 = vld [vmem:[%s1 + $0x50] sm:$0xff]
  %v41 = vld [vmem:[%s1 + $0x58] sm:$0xff]
  %v42 = vld [vmem:[%s1 + $0x60] sm:$0xff]
  %v43 = vld [vmem:[%s1 + $0x68] sm:$0xff]
  %v44 = vld [vmem:[%s1 + $0x70] sm:$0xff]
  %v45 = vld [vmem:[%s1 + $0x78] sm:$0xff]
  %46 = vmatprep.subr.mxu0 0.0
  %47 = vmatpush1.msra.mxu0 %v30
  %48 = vmatprep.subr.mxu0 0.0
  %49 = vmatpush1.msra.mxu0 %v31
  %50 = vmatprep.subr.mxu0 0.0
  %51 = vmatpush1.msra.mxu0 %v32
  %52 = vmatprep.subr.mxu0 0.0
  %53 = vmatpush1.msra.mxu0 %v33
  %54 = vmatprep.subr.mxu0 0.0
  %55 = vmatpush1.msra.mxu0 %v34
  %56 = vmatprep.subr.mxu0 0.0
  %57 = vmatpush1.msra.mxu0 %v35
  %58 = vmatprep.subr.mxu0 0.0
  %59 = vmatpush1.msra.mxu0 %v36
  %60 = vmatprep.subr.mxu0 0.0
  %61 = vmatpush1.msra.mxu0 %v37
  %62 = vmatprep.subr.mxu0 0.0
  %63 = vmatpush1.msra.mxu0 %v38
  %64 = vmatprep.subr.mxu0 0.0
  %65 = vmatpush1.msra.mxu0 %v39
  %66 = vmatprep.subr.mxu0 0.0
  %67 = vmatpush1.msra.mxu0 %v40
  %68 = vmatprep.subr.mxu0 0.0
  %69 = vmatpush1.msra.mxu0 %v41
  %70 = vmatprep.subr.mxu0 0.0
  %71 = vmatpush1.msra.mxu0 %v42
  %72 = vmatprep.subr.mxu0 0.0
  %73 = vmatpush1.msra.mxu0 %v43
  %74 = vmatprep.subr.mxu0 0.0
  %75 = vmatpush1.msra.mxu0 %v44
  %76 = vmatprep.subr.mxu0 0.0
  %77 = vmatpush1.msra.mxu0 %v45
  %78 = vmatprep.subr.mxu0 0.0
  %79 = vmatpush1.msra.mxu0 0.0
  %80 = vmatprep.subr.mxu0 0.0
  %81 = vmatpush1.msra.mxu0 0.0
  %82 = vmatprep.subr.mxu0 0.0
  %83 = vmatpush1.msra.mxu0 0.0
  %84 = vmatprep.subr.mxu0 0.0
  %85 = vmatpush1.msra.mxu0 0.0
  %86 = vmatprep.subr.mxu0 0.0
  %87 = vmatpush1.msra.mxu0 0.0
  %88 = vmatprep.subr.mxu0 0.0
  %89 = vmatpush1.msra.mxu0 0.0
  %90 = vmatprep.subr.mxu0 0.0
  %91 = vmatpush1.msra.mxu0 0.0
  %92 = vmatprep.subr.mxu0 0.0
  %93 = vmatpush1.msra.mxu0 0.0
  %94 = vmatprep.subr.mxu0 0.0
  %95 = vmatpush1.msra.mxu0 0.0
  %96 = vmatprep.subr.mxu0 0.0
  %97 = vmatpush1.msra.mxu0 0.0
  %98 = vmatprep.subr.mxu0 0.0
  %99 = vmatpush1.msra.mxu0 0.0
  %100 = vmatprep.subr.mxu0 0.0
  %101 = vmatpush1.msra.mxu0 0.0
  %102 = vmatprep.subr.mxu0 0.0
  %103 = vmatpush1.msra.mxu0 0.0
  %104 = vmatprep.subr.mxu0 0.0
  %105 = vmatpush1.msra.mxu0 0.0
  %106 = vmatprep.subr.mxu0 0.0
  %107 = vmatpush1.msra.mxu0 0.0
  %108 = vmatprep.subr.mxu0 0.0
  %109 = vmatpush1.msra.mxu0 0.0
  %110 = vmatprep.mubr.f32.mxu0 0.0
  %111 = vmatmul.mubr.f32.gmra.mrb[0].mxu0 %v29
  %v112 = vpop.f32.mrb[0].mxu0
  %v113 = vadd.f32 0.0, %v112
  %v114 = vpop.f32.mrb[0].mxu0
  %115 = vdwg.mxu0
  %v116 = vadd.f32 %v28, %v113
  %117 = vst [vmem:[#allocation2] sm:$0xff] %v116
  // Predicated region
  $region30: #{_device_forward.9} parent=0 // pred_check
    %p118 = pneg %p23
  $region31: #{_device_forward.9} parent=0 // pred_check_branch
    %120 = sbr.rel (%p118) target = $region33
  $region32: #{_device_forward.9} parent=0 // pred_region
    %v121 = vld [vmem:[#allocation2] sm:$0xff]
    %v122 = vld [vmem:[%s2] sm:$0xff]
    %v123 = vld [vmem:[%s2 + $0x8] sm:$0xff]
    %v124 = vld [vmem:[%s2 + $0x10] sm:$0xff]
    %v125 = vld [vmem:[%s2 + $0x18] sm:$0xff]
    %v126 = vld [vmem:[%s2 + $0x20] sm:$0xff]
    %v127 = vld [vmem:[%s2 + $0x28] sm:$0xff]
    %v128 = vld [vmem:[%s2 + $0x30] sm:$0xff]
    %v129 = vld [vmem:[%s2 + $0x38] sm:$0xff]
    %v130 = vld [vmem:[%s2 + $0x40] sm:$0xff]
    %v131 = vld [vmem:[%s2 + $0x48] sm:$0xff]
    %v132 = vld [vmem:[%s2 + $0x50] sm:$0xff]
    %v133 = vld [vmem:[%s2 + $0x58] sm:$0xff]
    %v134 = vld [vmem:[%s2 + $0x60] sm:$0xff]
    %v135 = vld [vmem:[%s2 + $0x68] sm:$0xff]
    %v136 = vld [vmem:[%s2 + $0x70] sm:$0xff]
    %v137 = vld [vmem:[%s2 + $0x78] sm:$0xff]
    %v138 = vld [vmem:[%s3] sm:$0x1]
    %v140 = vlaneseq
    %v141 = vshrl.u32 %v140, 7
    %v142 = vsub.s32 0, %v141
    %v143 = vrot.slane %v138, %v142
    %145 = vmatprep.subr.mxu0 0.0
    %146 = vmatpush1.msra.mxu0 %v122
    %147 = vmatprep.subr.mxu0 0.0
    %148 = vmatpush1.msra.mxu0 %v123
    %149 = vmatprep.subr.mxu0 0.0
    %150 = vmatpush1.msra.mxu0 %v124
    %151 = vmatprep.subr.mxu0 0.0
    %152 = vmatpush1.msra.mxu0 %v125
    %153 = vmatprep.subr.mxu0 0.0
    %154 = vmatpush1.msra.mxu0 %v126
    %155 = vmatprep.subr.mxu0 0.0
    %156 = vmatpush1.msra.mxu0 %v127
    %157 = vmatprep.subr.mxu0 0.0
    %158 = vmatpush1.msra.mxu0 %v128
    %159 = vmatprep.subr.mxu0 0.0
    %160 = vmatpush1.msra.mxu0 %v129
    %161 = vmatprep.subr.mxu0 0.0
    %162 = vmatpush1.msra.mxu0 %v130
    %163 = vmatprep.subr.mxu0 0.0
    %164 = vmatpush1.msra.mxu0 %v131
    %165 = vmatprep.subr.mxu0 0.0
    %166 = vmatpush1.msra.mxu0 %v132
    %167 = vmatprep.subr.mxu0 0.0
    %168 = vmatpush1.msra.mxu0 %v133
    %169 = vmatprep.subr.mxu0 0.0
    %170 = vmatpush1.msra.mxu0 %v134
    %171 = vmatprep.subr.mxu0 0.0
    %172 = vmatpush1.msra.mxu0 %v135
    %173 = vmatprep.subr.mxu0 0.0
    %174 = vmatpush1.msra.mxu0 %v136
    %175 = vmatprep.subr.mxu0 0.0
    %176 = vmatpush1.msra.mxu0 %v137
    %177 = vmatprep.subr.mxu0 0.0
    %178 = vmatpush1.msra.mxu0 0.0
    %179 = vmatprep.subr.mxu0 0.0
    %180 = vmatpush1.msra.mxu0 0.0
    %181 = vmatprep.subr.mxu0 0.0
    %182 = vmatpush1.msra.mxu0 0.0
    %183 = vmatprep.subr.mxu0 0.0
    %184 = vmatpush1.msra.mxu0 0.0
    %185 = vmatprep.subr.mxu0 0.0
    %186 = vmatpush1.msra.mxu0 0.0
    %187 = vmatprep.subr.mxu0 0.0
    %188 = vmatpush1.msra.mxu0 0.0
    %189 = vmatprep.subr.mxu0 0.0
    %190 = vmatpush1.msra.mxu0 0.0
    %191 = vmatprep.subr.mxu0 0.0
    %192 = vmatpush1.msra.mxu0 0.0
    %193 = vmatprep.subr.mxu0 0.0
    %194 = vmatpush1.msra.mxu0 0.0
    %195 = vmatprep.subr.mxu0 0.0
    %196 = vmatpush1.msra.mxu0 0.0
    %197 = vmatprep.subr.mxu0 0.0
    %198 = vmatpush1.msra.mxu0 0.0
    %199 = vmatprep.subr.mxu0 0.0
    %200 = vmatpush1.msra.mxu0 0.0
    %201 = vmatprep.subr.mxu0 0.0
    %202 = vmatpush1.msra.mxu0 0.0
    %203 = vmatprep.subr.mxu0 0.0
    %204 = vmatpush1.msra.mxu0 0.0
    %205 = vmatprep.subr.mxu0 0.0
    %206 = vmatpush1.msra.mxu0 0.0
    %207 = vmatprep.subr.mxu0 0.0
    %208 = vmatpush1.msra.mxu0 0.0
    %209 = vmatprep.mubr.f32.mxu0 0.0
    %210 = vmatmul.mubr.f32.gmra.mrb[0].mxu0 %v121
    %v211 = vpop.f32.mrb[0].mxu0
    %v212 = vadd.f32 %v143, %v211
    %v213 = vpop.f32.mrb[0].mxu0
    %214 = vdwg.mxu0
    %v215 = vmax.f32 %v212, 0.0
    %v216 = vld [vmem:[%s4] sm:$0xff]
    %v217 = vld [vmem:[%s4 + $0x8] sm:$0xff]
    %v218 = vld [vmem:[%s4 + $0x10] sm:$0xff]
    %v219 = vld [vmem:[%s4 + $0x18] sm:$0xff]
    %v220 = vld [vmem:[%s4 + $0x20] sm:$0xff]
    %v221 = vld [vmem:[%s4 + $0x28] sm:$0xff]
    %v222 = vld [vmem:[%s4 + $0x30] sm:$0xff]
    %v223 = vld [vmem:[%s4 + $0x38] sm:$0xff]
    %v224 = vld [vmem:[%s4 + $0x40] sm:$0xff]
    %v225 = vld [vmem:[%s4 + $0x48] sm:$0xff]
    %v226 = vld [vmem:[%s4 + $0x50] sm:$0xff]
    %v227 = vld [vmem:[%s4 + $0x58] sm:$0xff]
    %v228 = vld [vmem:[%s4 + $0x60] sm:$0xff]
    %v229 = vld [vmem:[%s4 + $0x68] sm:$0xff]
    %v230 = vld [vmem:[%s4 + $0x70] sm:$0xff]
    %v231 = vld [vmem:[%s4 + $0x78] sm:$0xff]
    %v232 = vld [vmem:[%s5] sm:$0x1]
    %v234 = vlaneseq
    %v235 = vshrl.u32 %v234, 7
    %v236 = vsub.s32 0, %v235
    %v237 = vrot.slane %v232, %v236
    %239 = vmatprep.subr.mxu0 0.0
    %240 = vmatpush1.msra.mxu0 %v216
    %241 = vmatprep.subr.mxu0 0.0
    %242 = vmatpush1.msra.mxu0 %v217
    %243 = vmatprep.subr.mxu0 0.0
    %244 = vmatpush1.msra.mxu0 %v218
    %245 = vmatprep.subr.mxu0 0.0
    %246 = vmatpush1.msra.mxu0 %v219
    %247 = vmatprep.subr.mxu0 0.0
    %248 = vmatpush1.msra.mxu0 %v220
    %249 = vmatprep.subr.mxu0 0.0
    %250 = vmatpush1.msra.mxu0 %v221
    %251 = vmatprep.subr.mxu0 0.0
    %252 = vmatpush1.msra.mxu0 %v222
    %253 = vmatprep.subr.mxu0 0.0
    %254 = vmatpush1.msra.mxu0 %v223
    %255 = vmatprep.subr.mxu0 0.0
    %256 = vmatpush1.msra.mxu0 %v224
    %257 = vmatprep.subr.mxu0 0.0
    %258 = vmatpush1.msra.mxu0 %v225
    %259 = vmatprep.subr.mxu0 0.0
    %260 = vmatpush1.msra.mxu0 %v226
    %261 = vmatprep.subr.mxu0 0.0
    %262 = vmatpush1.msra.mxu0 %v227
    %263 = vmatprep.subr.mxu0 0.0
    %264 = vmatpush1.msra.mxu0 %v228
    %265 = vmatprep.subr.mxu0 0.0
    %266 = vmatpush1.msra.mxu0 %v229
    %267 = vmatprep.subr.mxu0 0.0
    %268 = vmatpush1.msra.mxu0 %v230
    %269 = vmatprep.subr.mxu0 0.0
    %270 = vmatpush1.msra.mxu0 %v231
    %271 = vmatprep.subr.mxu0 0.0
    %272 = vmatpush1.msra.mxu0 0.0
    %273 = vmatprep.subr.mxu0 0.0
    %274 = vmatpush1.msra.mxu0 0.0
    %275 = vmatprep.subr.mxu0 0.0
    %276 = vmatpush1.msra.mxu0 0.0
    %277 = vmatprep.subr.mxu0 0.0
    %278 = vmatpush1.msra.mxu0 0.0
    %279 = vmatprep.subr.mxu0 0.0
    %280 = vmatpush1.msra.mxu0 0.0
    %281 = vmatprep.subr.mxu0 0.0
    %282 = vmatpush1.msra.mxu0 0.0
    %283 = vmatprep.subr.mxu0 0.0
    %284 = vmatpush1.msra.mxu0 0.0
    %285 = vmatprep.subr.mxu0 0.0
    %286 = vmatpush1.msra.mxu0 0.0
    %287 = vmatprep.subr.mxu0 0.0
    %288 = vmatpush1.msra.mxu0 0.0
    %289 = vmatprep.subr.mxu0 0.0
    %290 = vmatpush1.msra.mxu0 0.0
    %291 = vmatprep.subr.mxu0 0.0
    %292 = vmatpush1.msra.mxu0 0.0
    %293 = vmatprep.subr.mxu0 0.0
    %294 = vmatpush1.msra.mxu0 0.0
    %295 = vmatprep.subr.mxu0 0.0
    %296 = vmatpush1.msra.mxu0 0.0
    %297 = vmatprep.subr.mxu0 0.0
    %298 = vmatpush1.msra.mxu0 0.0
    %299 = vmatprep.subr.mxu0 0.0
    %300 = vmatpush1.msra.mxu0 0.0
    %301 = vmatprep.subr.mxu0 0.0
    %302 = vmatpush1.msra.mxu0 0.0
    %303 = vmatprep.mubr.f32.mxu0 0.0
    %304 = vmatmul.mubr.f32.gmra.mrb[0].mxu0 %v215
    %v305 = vpop.f32.mrb[0].mxu0
    %v306 = vadd.f32 %v237, %v305
    %v307 = vpop.f32.mrb[0].mxu0
    %308 = vdwg.mxu0
    %v309 = vlaneseq
    %v310 = vand.u32 %v309, 127
    %vm311 = vcmp.lt.s32.totalorder %v310, 4
    %v312 = vsel %vm311, %v306, -1e+30
    %313 = vmax.xlane.f32.xlu0 %v312
    %v314 = vpop.xlane.xlu0 %313
    %v315 = vsub.f32 %v312, %v314
    %v316 = vmul.f32 %v315, 1.442695
    %v317 = vpow.pop %v316
    %318 = vadd.xlane.f32.xlu0 %v317
    %v319 = vpop.xlane.xlu0 %318
    %v320 = vlog2.pop %v319
    %v321 = vmul.f32 %v320, 0.6931472
    %v322 = vsub.f32 %v315, %v321
    %323 = vst [vmem:[%s6] sm:$0xff] %v322
  $region33: #{_device_forward.9} parent=0 // pred_fallthru
    _
  // Predicated region
  $region34: #{_device_forward.9} parent=0 // pred_check
    _
  $region35: #{_device_forward.9} parent=0 // pred_check_branch
    %325 = sbr.rel (0) target = $region37
  $region36: #{_device_forward.9} parent=0 // pred_region
    _
  $region37: #{_device_forward.9} parent=0 // pred_fallthru
    _
  // Predicated region
  $region38: #{_device_forward.9} parent=0 // pred_check
    _
  $region39: #{_device_forward.9} parent=0 // pred_check_branch
    %327 = sbr.rel (0) target = $region41
  $region40: #{_device_forward.9} parent=0 // pred_region
    _
  $region41: #{_device_forward.9} parent=0 // pred_fallthru
    _

</llo_original>
